<compile_context>
chip_gen: v6e
topology: v6e:2x2x1
jax: 0.10.0
libtpu: 0.0.40
codegen_flags: <defaults>
</compile_context>

<pallas_src>
import jax
import jax.numpy as jnp
from jax.experimental import pallas as pl
from jax.experimental.pallas import tpu as pltpu  # noqa: F401  (kept for TODO paths)


def _round_up(x, m):
    return ((x + m - 1) // m) * m


# ----------------------------------------------------------------------------
# Fused kernel: all LSTM layers + FC + sigmoid in one invocation (grid=())
# ----------------------------------------------------------------------------
def make_fused_kernel(num_layers, S, Bp, H, OUT):
    G = 4 * H

    def lstm_cell(gates, c):
        # Full-width nonlinearities: one sigmoid + one tanh pass over the whole (Bp, 4H)
        # gate register (2 EUP passes instead of 5 sliced ones).  Gate order [i, f, g, o].
        sig = jax.nn.sigmoid(gates)
        tnh = jnp.tanh(gates)
        i_g = sig[:, 0 * H:1 * H]
        f_g = sig[:, 1 * H:2 * H]
        g_g = tnh[:, 2 * H:3 * H]
        o_g = sig[:, 3 * H:4 * H]
        c_new = f_g * c + i_g * g_g
        h_new = o_g * jnp.tanh(c_new)
        return h_new, c_new

    def kernel(*refs):
        x_ref, wih0_ref, whh0_ref, b0_ref = refs[:4]
        pos = 4
        upper_refs = []
        for _ in range(num_layers - 1):
            upper_refs.append((refs[pos], refs[pos + 1], refs[pos + 2]))
            pos += 3
        fcw_ref = refs[pos]
        fcb_ref = refs[pos + 1]
        out_ref = refs[pos + 2]

        # Hoisted, time-parallel layer-0 input projection + bias: ONE tall MXU matmul
        # over all S*Bp rows.  Per-step consumption below is a tile-aligned 8-row slice.
        gx0 = (
            jnp.dot(x_ref[...], wih0_ref[...], preferred_element_type=jnp.float32)
            + b0_ref[...]
        )                                                        # (S*Bp, 4H)

        whh0 = whh0_ref[...]                                     # (H, 4H), loaded once
        upper_w = []
        for (wih_ref, whh_ref, b_ref) in upper_refs:
            upper_w.append((
                wih_ref[...],                                    # (H, 4H)
                whh_ref[...],                                    # (H, 4H)
                jnp.broadcast_to(b_ref[...], (Bp, G)),           # bias broadcast hoisted
            ))

        h = [jnp.zeros((Bp, H), jnp.float32) for _ in range(num_layers)]
        c = [jnp.zeros((Bp, H), jnp.float32) for _ in range(num_layers)]

        # Per-timestep wavefront over layers: layer l step t needs only layer l-1 step t
        # and layer l step t-1, so the dataflow depth is S + L - 1 and the LLO scheduler
        # can overlap layer l step t with layer 0 step t+1.  S is small & static -> full
        # unroll; all state lives in vregs (no scratch, no HBM round trips).
        for t in range(S):
            gates0 = gx0[t * Bp:(t + 1) * Bp, :] + jnp.dot(
                h[0], whh0, preferred_element_type=jnp.float32
            )                                                    # (Bp, 4H), aligned slice
            h[0], c[0] = lstm_cell(gates0, c[0])
            for l in range(1, num_layers):
                wih_l, whh_l, b_l = upper_w[l - 1]
                gates = (
                    jnp.dot(h[l - 1], wih_l, preferred_element_type=jnp.float32)
                    + jnp.dot(h[l], whh_l, preferred_element_type=jnp.float32)
                    + b_l
                )
                h[l], c[l] = lstm_cell(gates, c[l])

        # Classifier head: encoding = states[-1] == final hidden of the last layer.
        h_last = h[num_layers - 1]
        if OUT == 1:
            # VPU multiply + lane reduce: no N=1 MXU push/pop on the tail.
            z = jnp.sum(h_last * fcw_ref[...], axis=-1, keepdims=True) + fcb_ref[...]
        else:
            z = jnp.dot(h_last, fcw_ref[...], preferred_element_type=jnp.float32) + fcb_ref[...]
        out_ref[...] = jax.nn.sigmoid(z)

    return kernel


# ----------------------------------------------------------------------------
# Full forward (matches RNNClassifier.forward)
# ----------------------------------------------------------------------------
@jax.jit
def rnn_classifier_forward(x, prep):
    B, S, IN = x.shape
    H = prep["whh0"].shape[0]
    L = 1 + len(prep["upper"])
    OUT = prep["fc_b"].shape[-1]
    INp = prep["wih0"].shape[0]
    Bp = _round_up(B, 8)                       # pad batch to f32 sublane granularity

    # Glue (plain JAX): (B,S,IN) -> time-major, zero-pad batch rows + input features,
    # flatten to a (S*Bp, INp) lane-dense slab for the hoisted layer-0 projection.
    x_t = jnp.transpose(x, (1, 0, 2)).astype(jnp.float32)            # (S, B, IN)
    x_t = jnp.pad(x_t, ((0, 0), (0, Bp - B), (0, INp - IN)))
    x_flat = x_t.reshape(S * Bp, INp)

    inputs = [x_flat, prep["wih0"], prep["whh0"], prep["b0"]]
    for (wih_t, whh_t, b) in prep["upper"]:
        inputs += [wih_t, whh_t, b]
    inputs += [prep["fc_w"], prep["fc_b"]]
    in_specs = [pl.BlockSpec(a.shape, lambda: (0, 0)) for a in inputs]

    kernel = make_fused_kernel(L, S, Bp, H, OUT)
    out = pl.pallas_call(
        kernel,
        out_shape=jax.ShapeDtypeStruct((Bp, OUT), jnp.float32),
        grid=(),
        in_specs=in_specs,
        out_specs=pl.BlockSpec((Bp, OUT), lambda: (0, 0)),
    )(*inputs)
    return out[:B]                              # drop the pad rows


# ----------------------------------------------------------------------------
# Deterministic PyTorch-layout parameter init (same shapes / init range as nn.LSTM/Linear)
# ----------------------------------------------------------------------------
def init_params(key, input_size, hidden_size, num_layers, out_size):
    lstm = []
    k_lstm = 1.0 / jnp.sqrt(hidden_size)
    for layer in range(num_layers):
        in_sz = input_size if layer == 0 else hidden_size
        key, k1, k2, k3, k4 = jax.random.split(key, 5)
        w_ih = jax.random.uniform(k1, (4 * hidden_size, in_sz), jnp.float32, -k_lstm, k_lstm)
        w_hh = jax.random.uniform(k2, (4 * hidden_size, hidden_size), jnp.float32, -k_lstm, k_lstm)
        b_ih = jax.random.uniform(k3, (4 * hidden_size,), jnp.float32, -k_lstm, k_lstm)
        b_hh = jax.random.uniform(k4, (4 * hidden_size,), jnp.float32, -k_lstm, k_lstm)
        lstm.append((w_ih, w_hh, b_ih, b_hh))
    key, k5, k6 = jax.random.split(key, 3)
    k_fc = 1.0 / jnp.sqrt(hidden_size)
    fc_w = jax.random.uniform(k5, (out_size, hidden_size), jnp.float32, -k_fc, k_fc)
    fc_b = jax.random.uniform(k6, (out_size,), jnp.float32, -k_fc, k_fc)
    return {"lstm": lstm, "fc_w": fc_w, "fc_b": fc_b}


# ----------------------------------------------------------------------------
# One-time, host-side re-layout into kernel-ready params
# ----------------------------------------------------------------------------
def prepare_params(raw, input_size):
    (w_ih0, w_hh0, b_ih0, b_hh0) = raw["lstm"][0]
    four_h, H = w_hh0.shape
    INp = _round_up(input_size, 32)             # pad K of the layer-0 projection (19 -> 32)
    wih0_t = jnp.zeros((INp, four_h), jnp.float32).at[:input_size, :].set(w_ih0.T)
    prep = {
        "wih0": wih0_t,                         # (INp, 4H), lane-dense
        "whh0": w_hh0.T,                        # (H, 4H)
        "b0": (b_ih0 + b_hh0).reshape(1, four_h),
        "upper": [],
    }
    for (w_ih, w_hh, b_ih, b_hh) in raw["lstm"][1:]:
        prep["upper"].append((w_ih.T, w_hh.T, (b_ih + b_hh).reshape(1, four_h)))
    out_size = raw["fc_w"].shape[0]
    if out_size == 1:
        prep["fc_w"] = raw["fc_w"].reshape(1, H)          # row vector for VPU-reduce head
        prep["fc_b"] = raw["fc_b"].reshape(1, 1)
    else:
        prep["fc_w"] = raw["fc_w"].T                      # (H, OUT)
        prep["fc_b"] = raw["fc_b"].reshape(1, out_size)
    return prep


# ----------------------------------------------------------------------------
# Pure-JAX reference (faithful to the PyTorch module, for correctness check only)
# ----------------------------------------------------------------------------
def reference_forward(x, raw):
    x_seq = jnp.transpose(x, (1, 0, 2)).astype(jnp.float32)
    for (w_ih, w_hh, b_ih, b_hh) in raw["lstm"]:
        S, B, _ = x_seq.shape
        H = w_hh.shape[1]
        h = jnp.zeros((B, H), jnp.float32)
        c = jnp.zeros((B, H), jnp.float32)
        outs = []
        for t in range(S):
            gates = x_seq[t] @ w_ih.T + h @ w_hh.T + b_ih + b_hh
            i_g = jax.nn.sigmoid(gates[:, 0 * H:1 * H])
            f_g = jax.nn.sigmoid(gates[:, 1 * H:2 * H])
            g_g = jnp.tanh(gates[:, 2 * H:3 * H])
            o_g = jax.nn.sigmoid(gates[:, 3 * H:4 * H])
            c = f_g * c + i_g * g_g
            h = o_g * jnp.tanh(c)
            outs.append(h)
        x_seq = jnp.stack(outs, axis=0)
    return jax.nn.sigmoid(x_seq[-1] @ raw["fc_w"].T + raw["fc_b"])


if __name__ == "__main__":
    # Shapes implied by RNNClassifier defaults: input_size=19, hidden_size=32,
    # num_layers=2, out_size=1, unidirectional LSTM.  Small batch / short sequence.
    B, S, IN, H, L, OUT = 2, 8, 19, 32, 2, 1

    key = jax.random.PRNGKey(0)
    key, kp, kx = jax.random.split(key, 3)
    raw_params = init_params(kp, IN, H, L, OUT)
    prep = prepare_params(raw_params, IN)
    x = jax.random.normal(kx, (B, S, IN), jnp.float32)

    out = rnn_classifier_forward(x, prep)
    out = jax.block_until_ready(out)

    ref = reference_forward(x, raw_params)
    assert out.shape == (B, OUT)
    assert jnp.allclose(out, ref, atol=1e-4, rtol=1e-4), (out, ref)

    print("KERNEL_OK")
</pallas_src>

<mosaic_0001>
module attributes {stable_mosaic.version = 11 : i64} {
  func.func @kernel(%arg0: memref<64x32xf32, #tpu.memory_space<vmem>>, %arg1: memref<32x128xf32, #tpu.memory_space<vmem>>, %arg2: memref<32x128xf32, #tpu.memory_space<vmem>>, %arg3: memref<1x128xf32, #tpu.memory_space<vmem>>, %arg4: memref<32x128xf32, #tpu.memory_space<vmem>>, %arg5: memref<32x128xf32, #tpu.memory_space<vmem>>, %arg6: memref<1x128xf32, #tpu.memory_space<vmem>>, %arg7: memref<1x32xf32, #tpu.memory_space<vmem>>, %arg8: memref<1x1xf32, #tpu.memory_space<vmem>>, %arg9: memref<8x1xf32, #tpu.memory_space<vmem>>) attributes {dimension_semantics = [], scalar_prefetch = 0 : i64, scratch_operands = 0 : i64, tpu.core_type = #tpu.core_type<tc>} {
    %c0 = arith.constant 0 : index
    %c0_0 = arith.constant 0 : index
    %0 = vector.load %arg0[%c0, %c0_0] : memref<64x32xf32, #tpu.memory_space<vmem>>, vector<64x32xf32>
    %c0_1 = arith.constant 0 : index
    %c0_2 = arith.constant 0 : index
    %1 = vector.load %arg1[%c0_1, %c0_2] : memref<32x128xf32, #tpu.memory_space<vmem>>, vector<32x128xf32>
    %cst = arith.constant dense<0.000000e+00> : vector<64x128xf32>
    %2 = tpu.matmul %0, %1, %cst {dimension_numbers = #tpu.dot_dimension_numbers<[1], [0], [0], [1], [0, 0, 1, 1], [], []>} : vector<64x32xf32>, vector<32x128xf32>, vector<64x128xf32> -> vector<64x128xf32>
    %c0_3 = arith.constant 0 : index
    %c0_4 = arith.constant 0 : index
    %3 = vector.load %arg3[%c0_3, %c0_4] : memref<1x128xf32, #tpu.memory_space<vmem>>, vector<1x128xf32>
    %4 = vector.broadcast %3 : vector<1x128xf32> to vector<64x128xf32>
    %5 = arith.addf %2, %4 : vector<64x128xf32>
    %c0_5 = arith.constant 0 : index
    %c0_6 = arith.constant 0 : index
    %6 = vector.load %arg2[%c0_5, %c0_6] : memref<32x128xf32, #tpu.memory_space<vmem>>, vector<32x128xf32>
    %c0_7 = arith.constant 0 : index
    %c0_8 = arith.constant 0 : index
    %7 = vector.load %arg4[%c0_7, %c0_8] : memref<32x128xf32, #tpu.memory_space<vmem>>, vector<32x128xf32>
    %c0_9 = arith.constant 0 : index
    %c0_10 = arith.constant 0 : index
    %8 = vector.load %arg5[%c0_9, %c0_10] : memref<32x128xf32, #tpu.memory_space<vmem>>, vector<32x128xf32>
    %c0_11 = arith.constant 0 : index
    %c0_12 = arith.constant 0 : index
    %9 = vector.load %arg6[%c0_11, %c0_12] : memref<1x128xf32, #tpu.memory_space<vmem>>, vector<1x128xf32>
    %10 = vector.shape_cast %9 : vector<1x128xf32> to vector<1x128xf32>
    %11 = vector.broadcast %10 : vector<1x128xf32> to vector<8x128xf32>
    %cst_13 = arith.constant 0.000000e+00 : f32
    %12 = vector.broadcast %cst_13 : f32 to vector<8x32xf32>
    %cst_14 = arith.constant 0.000000e+00 : f32
    %13 = vector.broadcast %cst_14 : f32 to vector<8x32xf32>
    %cst_15 = arith.constant 0.000000e+00 : f32
    %14 = vector.broadcast %cst_15 : f32 to vector<8x32xf32>
    %cst_16 = arith.constant 0.000000e+00 : f32
    %15 = vector.broadcast %cst_16 : f32 to vector<8x32xf32>
    %16 = vector.extract_strided_slice %5 {offsets = [0, 0], sizes = [8, 128], strides = [1, 1]} : vector<64x128xf32> to vector<8x128xf32>
    %cst_17 = arith.constant dense<0.000000e+00> : vector<8x128xf32>
    %17 = tpu.matmul %12, %6, %cst_17 {dimension_numbers = #tpu.dot_dimension_numbers<[1], [0], [0], [1], [0, 0, 1, 1], [], []>} : vector<8x32xf32>, vector<32x128xf32>, vector<8x128xf32> -> vector<8x128xf32>
    %18 = arith.addf %16, %17 : vector<8x128xf32>
    %19 = arith.negf %18 : vector<8x128xf32>
    %20 = math.exp %19 : vector<8x128xf32>
    %cst_18 = arith.constant 1.000000e+00 : f32
    %21 = vector.broadcast %cst_18 : f32 to vector<8x128xf32>
    %22 = arith.addf %21, %20 : vector<8x128xf32>
    %23 = arith.divf %21, %22 : vector<8x128xf32>
    %24 = math.tanh %18 : vector<8x128xf32>
    %25 = vector.extract_strided_slice %23 {offsets = [0, 0], sizes = [8, 32], strides = [1, 1]} : vector<8x128xf32> to vector<8x32xf32>
    %26 = vector.extract_strided_slice %23 {offsets = [0, 32], sizes = [8, 32], strides = [1, 1]} : vector<8x128xf32> to vector<8x32xf32>
    %27 = vector.extract_strided_slice %24 {offsets = [0, 64], sizes = [8, 32], strides = [1, 1]} : vector<8x128xf32> to vector<8x32xf32>
    %28 = vector.extract_strided_slice %23 {offsets = [0, 96], sizes = [8, 32], strides = [1, 1]} : vector<8x128xf32> to vector<8x32xf32>
    %29 = arith.mulf %26, %14 : vector<8x32xf32>
    %30 = arith.mulf %25, %27 : vector<8x32xf32>
    %31 = arith.addf %29, %30 : vector<8x32xf32>
    %32 = math.tanh %31 : vector<8x32xf32>
    %33 = arith.mulf %28, %32 : vector<8x32xf32>
    %cst_19 = arith.constant dense<0.000000e+00> : vector<8x128xf32>
    %34 = tpu.matmul %33, %7, %cst_19 {dimension_numbers = #tpu.dot_dimension_numbers<[1], [0], [0], [1], [0, 0, 1, 1], [], []>} : vector<8x32xf32>, vector<32x128xf32>, vector<8x128xf32> -> vector<8x128xf32>
    %cst_20 = arith.constant dense<0.000000e+00> : vector<8x128xf32>
    %35 = tpu.matmul %13, %8, %cst_20 {dimension_numbers = #tpu.dot_dimension_numbers<[1], [0], [0], [1], [0, 0, 1, 1], [], []>} : vector<8x32xf32>, vector<32x128xf32>, vector<8x128xf32> -> vector<8x128xf32>
    %36 = arith.addf %34, %35 : vector<8x128xf32>
    %37 = arith.addf %36, %11 : vector<8x128xf32>
    %38 = arith.negf %37 : vector<8x128xf32>
    %39 = math.exp %38 : vector<8x128xf32>
    %cst_21 = arith.constant 1.000000e+00 : f32
    %40 = vector.broadcast %cst_21 : f32 to vector<8x128xf32>
    %41 = arith.addf %40, %39 : vector<8x128xf32>
    %42 = arith.divf %40, %41 : vector<8x128xf32>
    %43 = math.tanh %37 : vector<8x128xf32>
    %44 = vector.extract_strided_slice %42 {offsets = [0, 0], sizes = [8, 32], strides = [1, 1]} : vector<8x128xf32> to vector<8x32xf32>
    %45 = vector.extract_strided_slice %42 {offsets = [0, 32], sizes = [8, 32], strides = [1, 1]} : vector<8x128xf32> to vector<8x32xf32>
    %46 = vector.extract_strided_slice %43 {offsets = [0, 64], sizes = [8, 32], strides = [1, 1]} : vector<8x128xf32> to vector<8x32xf32>
    %47 = vector.extract_strided_slice %42 {offsets = [0, 96], sizes = [8, 32], strides = [1, 1]} : vector<8x128xf32> to vector<8x32xf32>
    %48 = arith.mulf %45, %15 : vector<8x32xf32>
    %49 = arith.mulf %44, %46 : vector<8x32xf32>
    %50 = arith.addf %48, %49 : vector<8x32xf32>
    %51 = math.tanh %50 : vector<8x32xf32>
    %52 = arith.mulf %47, %51 : vector<8x32xf32>
    %53 = vector.extract_strided_slice %5 {offsets = [8, 0], sizes = [8, 128], strides = [1, 1]} : vector<64x128xf32> to vector<8x128xf32>
    %cst_22 = arith.constant dense<0.000000e+00> : vector<8x128xf32>
    %54 = tpu.matmul %33, %6, %cst_22 {dimension_numbers = #tpu.dot_dimension_numbers<[1], [0], [0], [1], [0, 0, 1, 1], [], []>} : vector<8x32xf32>, vector<32x128xf32>, vector<8x128xf32> -> vector<8x128xf32>
    %55 = arith.addf %53, %54 : vector<8x128xf32>
    %56 = arith.negf %55 : vector<8x128xf32>
    %57 = math.exp %56 : vector<8x128xf32>
    %cst_23 = arith.constant 1.000000e+00 : f32
    %58 = vector.broadcast %cst_23 : f32 to vector<8x128xf32>
    %59 = arith.addf %58, %57 : vector<8x128xf32>
    %60 = arith.divf %58, %59 : vector<8x128xf32>
    %61 = math.tanh %55 : vector<8x128xf32>
    %62 = vector.extract_strided_slice %60 {offsets = [0, 0], sizes = [8, 32], strides = [1, 1]} : vector<8x128xf32> to vector<8x32xf32>
    %63 = vector.extract_strided_slice %60 {offsets = [0, 32], sizes = [8, 32], strides = [1, 1]} : vector<8x128xf32> to vector<8x32xf32>
    %64 = vector.extract_strided_slice %61 {offsets = [0, 64], sizes = [8, 32], strides = [1, 1]} : vector<8x128xf32> to vector<8x32xf32>
    %65 = vector.extract_strided_slice %60 {offsets = [0, 96], sizes = [8, 32], strides = [1, 1]} : vector<8x128xf32> to vector<8x32xf32>
    %66 = arith.mulf %63, %31 : vector<8x32xf32>
    %67 = arith.mulf %62, %64 : vector<8x32xf32>
    %68 = arith.addf %66, %67 : vector<8x32xf32>
    %69 = math.tanh %68 : vector<8x32xf32>
    %70 = arith.mulf %65, %69 : vector<8x32xf32>
    %cst_24 = arith.constant dense<0.000000e+00> : vector<8x128xf32>
    %71 = tpu.matmul %70, %7, %cst_24 {dimension_numbers = #tpu.dot_dimension_numbers<[1], [0], [0], [1], [0, 0, 1, 1], [], []>} : vector<8x32xf32>, vector<32x128xf32>, vector<8x128xf32> -> vector<8x128xf32>
    %cst_25 = arith.constant dense<0.000000e+00> : vector<8x128xf32>
    %72 = tpu.matmul %52, %8, %cst_25 {dimension_numbers = #tpu.dot_dimension_numbers<[1], [0], [0], [1], [0, 0, 1, 1], [], []>} : vector<8x32xf32>, vector<32x128xf32>, vector<8x128xf32> -> vector<8x128xf32>
    %73 = arith.addf %71, %72 : vector<8x128xf32>
    %74 = arith.addf %73, %11 : vector<8x128xf32>
    %75 = arith.negf %74 : vector<8x128xf32>
    %76 = math.exp %75 : vector<8x128xf32>
    %cst_26 = arith.constant 1.000000e+00 : f32
    %77 = vector.broadcast %cst_26 : f32 to vector<8x128xf32>
    %78 = arith.addf %77, %76 : vector<8x128xf32>
    %79 = arith.divf %77, %78 : vector<8x128xf32>
    %80 = math.tanh %74 : vector<8x128xf32>
    %81 = vector.extract_strided_slice %79 {offsets = [0, 0], sizes = [8, 32], strides = [1, 1]} : vector<8x128xf32> to vector<8x32xf32>
    %82 = vector.extract_strided_slice %79 {offsets = [0, 32], sizes = [8, 32], strides = [1, 1]} : vector<8x128xf32> to vector<8x32xf32>
    %83 = vector.extract_strided_slice %80 {offsets = [0, 64], sizes = [8, 32], strides = [1, 1]} : vector<8x128xf32> to vector<8x32xf32>
    %84 = vector.extract_strided_slice %79 {offsets = [0, 96], sizes = [8, 32], strides = [1, 1]} : vector<8x128xf32> to vector<8x32xf32>
    %85 = arith.mulf %82, %50 : vector<8x32xf32>
    %86 = arith.mulf %81, %83 : vector<8x32xf32>
    %87 = arith.addf %85, %86 : vector<8x32xf32>
    %88 = math.tanh %87 : vector<8x32xf32>
    %89 = arith.mulf %84, %88 : vector<8x32xf32>
    %90 = vector.extract_strided_slice %5 {offsets = [16, 0], sizes = [8, 128], strides = [1, 1]} : vector<64x128xf32> to vector<8x128xf32>
    %cst_27 = arith.constant dense<0.000000e+00> : vector<8x128xf32>
    %91 = tpu.matmul %70, %6, %cst_27 {dimension_numbers = #tpu.dot_dimension_numbers<[1], [0], [0], [1], [0, 0, 1, 1], [], []>} : vector<8x32xf32>, vector<32x128xf32>, vector<8x128xf32> -> vector<8x128xf32>
    %92 = arith.addf %90, %91 : vector<8x128xf32>
    %93 = arith.negf %92 : vector<8x128xf32>
    %94 = math.exp %93 : vector<8x128xf32>
    %cst_28 = arith.constant 1.000000e+00 : f32
    %95 = vector.broadcast %cst_28 : f32 to vector<8x128xf32>
    %96 = arith.addf %95, %94 : vector<8x128xf32>
    %97 = arith.divf %95, %96 : vector<8x128xf32>
    %98 = math.tanh %92 : vector<8x128xf32>
    %99 = vector.extract_strided_slice %97 {offsets = [0, 0], sizes = [8, 32], strides = [1, 1]} : vector<8x128xf32> to vector<8x32xf32>
    %100 = vector.extract_strided_slice %97 {offsets = [0, 32], sizes = [8, 32], strides = [1, 1]} : vector<8x128xf32> to vector<8x32xf32>
    %101 = vector.extract_strided_slice %98 {offsets = [0, 64], sizes = [8, 32], strides = [1, 1]} : vector<8x128xf32> to vector<8x32xf32>
    %102 = vector.extract_strided_slice %97 {offsets = [0, 96], sizes = [8, 32], strides = [1, 1]} : vector<8x128xf32> to vector<8x32xf32>
    %103 = arith.mulf %100, %68 : vector<8x32xf32>
    %104 = arith.mulf %99, %101 : vector<8x32xf32>
    %105 = arith.addf %103, %104 : vector<8x32xf32>
    %106 = math.tanh %105 : vector<8x32xf32>
    %107 = arith.mulf %102, %106 : vector<8x32xf32>
    %cst_29 = arith.constant dense<0.000000e+00> : vector<8x128xf32>
    %108 = tpu.matmul %107, %7, %cst_29 {dimension_numbers = #tpu.dot_dimension_numbers<[1], [0], [0], [1], [0, 0, 1, 1], [], []>} : vector<8x32xf32>, vector<32x128xf32>, vector<8x128xf32> -> vector<8x128xf32>
    %cst_30 = arith.constant dense<0.000000e+00> : vector<8x128xf32>
    %109 = tpu.matmul %89, %8, %cst_30 {dimension_numbers = #tpu.dot_dimension_numbers<[1], [0], [0], [1], [0, 0, 1, 1], [], []>} : vector<8x32xf32>, vector<32x128xf32>, vector<8x128xf32> -> vector<8x128xf32>
    %110 = arith.addf %108, %109 : vector<8x128xf32>
    %111 = arith.addf %110, %11 : vector<8x128xf32>
    %112 = arith.negf %111 : vector<8x128xf32>
    %113 = math.exp %112 : vector<8x128xf32>
    %cst_31 = arith.constant 1.000000e+00 : f32
    %114 = vector.broadcast %cst_31 : f32 to vector<8x128xf32>
    %115 = arith.addf %114, %113 : vector<8x128xf32>
    %116 = arith.divf %114, %115 : vector<8x128xf32>
    %117 = math.tanh %111 : vector<8x128xf32>
    %118 = vector.extract_strided_slice %116 {offsets = [0, 0], sizes = [8, 32], strides = [1, 1]} : vector<8x128xf32> to vector<8x32xf32>
    %119 = vector.extract_strided_slice %116 {offsets = [0, 32], sizes = [8, 32], strides = [1, 1]} : vector<8x128xf32> to vector<8x32xf32>
    %120 = vector.extract_strided_slice %117 {offsets = [0, 64], sizes = [8, 32], strides = [1, 1]} : vector<8x128xf32> to vector<8x32xf32>
    %121 = vector.extract_strided_slice %116 {offsets = [0, 96], sizes = [8, 32], strides = [1, 1]} : vector<8x128xf32> to vector<8x32xf32>
    %122 = arith.mulf %119, %87 : vector<8x32xf32>
    %123 = arith.mulf %118, %120 : vector<8x32xf32>
    %124 = arith.addf %122, %123 : vector<8x32xf32>
    %125 = math.tanh %124 : vector<8x32xf32>
    %126 = arith.mulf %121, %125 : vector<8x32xf32>
    %127 = vector.extract_strided_slice %5 {offsets = [24, 0], sizes = [8, 128], strides = [1, 1]} : vector<64x128xf32> to vector<8x128xf32>
    %cst_32 = arith.constant dense<0.000000e+00> : vector<8x128xf32>
    %128 = tpu.matmul %107, %6, %cst_32 {dimension_numbers = #tpu.dot_dimension_numbers<[1], [0], [0], [1], [0, 0, 1, 1], [], []>} : vector<8x32xf32>, vector<32x128xf32>, vector<8x128xf32> -> vector<8x128xf32>
    %129 = arith.addf %127, %128 : vector<8x128xf32>
    %130 = arith.negf %129 : vector<8x128xf32>
    %131 = math.exp %130 : vector<8x128xf32>
    %cst_33 = arith.constant 1.000000e+00 : f32
    %132 = vector.broadcast %cst_33 : f32 to vector<8x128xf32>
    %133 = arith.addf %132, %131 : vector<8x128xf32>
    %134 = arith.divf %132, %133 : vector<8x128xf32>
    %135 = math.tanh %129 : vector<8x128xf32>
    %136 = vector.extract_strided_slice %134 {offsets = [0, 0], sizes = [8, 32], strides = [1, 1]} : vector<8x128xf32> to vector<8x32xf32>
    %137 = vector.extract_strided_slice %134 {offsets = [0, 32], sizes = [8, 32], strides = [1, 1]} : vector<8x128xf32> to vector<8x32xf32>
    %138 = vector.extract_strided_slice %135 {offsets = [0, 64], sizes = [8, 32], strides = [1, 1]} : vector<8x128xf32> to vector<8x32xf32>
    %139 = vector.extract_strided_slice %134 {offsets = [0, 96], sizes = [8, 32], strides = [1, 1]} : vector<8x128xf32> to vector<8x32xf32>
    %140 = arith.mulf %137, %105 : vector<8x32xf32>
    %141 = arith.mulf %136, %138 : vector<8x32xf32>
    %142 = arith.addf %140, %141 : vector<8x32xf32>
    %143 = math.tanh %142 : vector<8x32xf32>
    %144 = arith.mulf %139, %143 : vector<8x32xf32>
    %cst_34 = arith.constant dense<0.000000e+00> : vector<8x128xf32>
    %145 = tpu.matmul %144, %7, %cst_34 {dimension_numbers = #tpu.dot_dimension_numbers<[1], [0], [0], [1], [0, 0, 1, 1], [], []>} : vector<8x32xf32>, vector<32x128xf32>, vector<8x128xf32> -> vector<8x128xf32>
    %cst_35 = arith.constant dense<0.000000e+00> : vector<8x128xf32>
    %146 = tpu.matmul %126, %8, %cst_35 {dimension_numbers = #tpu.dot_dimension_numbers<[1], [0], [0], [1], [0, 0, 1, 1], [], []>} : vector<8x32xf32>, vector<32x128xf32>, vector<8x128xf32> -> vector<8x128xf32>
    %147 = arith.addf %145, %146 : vector<8x128xf32>
    %148 = arith.addf %147, %11 : vector<8x128xf32>
    %149 = arith.negf %148 : vector<8x128xf32>
    %150 = math.exp %149 : vector<8x128xf32>
    %cst_36 = arith.constant 1.000000e+00 : f32
    %151 = vector.broadcast %cst_36 : f32 to vector<8x128xf32>
    %152 = arith.addf %151, %150 : vector<8x128xf32>
    %153 = arith.divf %151, %152 : vector<8x128xf32>
    %154 = math.tanh %148 : vector<8x128xf32>
    %155 = vector.extract_strided_slice %153 {offsets = [0, 0], sizes = [8, 32], strides = [1, 1]} : vector<8x128xf32> to vector<8x32xf32>
    %156 = vector.extract_strided_slice %153 {offsets = [0, 32], sizes = [8, 32], strides = [1, 1]} : vector<8x128xf32> to vector<8x32xf32>
    %157 = vector.extract_strided_slice %154 {offsets = [0, 64], sizes = [8, 32], strides = [1, 1]} : vector<8x128xf32> to vector<8x32xf32>
    %158 = vector.extract_strided_slice %153 {offsets = [0, 96], sizes = [8, 32], strides = [1, 1]} : vector<8x128xf32> to vector<8x32xf32>
    %159 = arith.mulf %156, %124 : vector<8x32xf32>
    %160 = arith.mulf %155, %157 : vector<8x32xf32>
    %161 = arith.addf %159, %160 : vector<8x32xf32>
    %162 = math.tanh %161 : vector<8x32xf32>
    %163 = arith.mulf %158, %162 : vector<8x32xf32>
    %164 = vector.extract_strided_slice %5 {offsets = [32, 0], sizes = [8, 128], strides = [1, 1]} : vector<64x128xf32> to vector<8x128xf32>
    %cst_37 = arith.constant dense<0.000000e+00> : vector<8x128xf32>
    %165 = tpu.matmul %144, %6, %cst_37 {dimension_numbers = #tpu.dot_dimension_numbers<[1], [0], [0], [1], [0, 0, 1, 1], [], []>} : vector<8x32xf32>, vector<32x128xf32>, vector<8x128xf32> -> vector<8x128xf32>
    %166 = arith.addf %164, %165 : vector<8x128xf32>
    %167 = arith.negf %166 : vector<8x128xf32>
    %168 = math.exp %167 : vector<8x128xf32>
    %cst_38 = arith.constant 1.000000e+00 : f32
    %169 = vector.broadcast %cst_38 : f32 to vector<8x128xf32>
    %170 = arith.addf %169, %168 : vector<8x128xf32>
    %171 = arith.divf %169, %170 : vector<8x128xf32>
    %172 = math.tanh %166 : vector<8x128xf32>
    %173 = vector.extract_strided_slice %171 {offsets = [0, 0], sizes = [8, 32], strides = [1, 1]} : vector<8x128xf32> to vector<8x32xf32>
    %174 = vector.extract_strided_slice %171 {offsets = [0, 32], sizes = [8, 32], strides = [1, 1]} : vector<8x128xf32> to vector<8x32xf32>
    %175 = vector.extract_strided_slice %172 {offsets = [0, 64], sizes = [8, 32], strides = [1, 1]} : vector<8x128xf32> to vector<8x32xf32>
    %176 = vector.extract_strided_slice %171 {offsets = [0, 96], sizes = [8, 32], strides = [1, 1]} : vector<8x128xf32> to vector<8x32xf32>
    %177 = arith.mulf %174, %142 : vector<8x32xf32>
    %178 = arith.mulf %173, %175 : vector<8x32xf32>
    %179 = arith.addf %177, %178 : vector<8x32xf32>
    %180 = math.tanh %179 : vector<8x32xf32>
    %181 = arith.mulf %176, %180 : vector<8x32xf32>
    %cst_39 = arith.constant dense<0.000000e+00> : vector<8x128xf32>
    %182 = tpu.matmul %181, %7, %cst_39 {dimension_numbers = #tpu.dot_dimension_numbers<[1], [0], [0], [1], [0, 0, 1, 1], [], []>} : vector<8x32xf32>, vector<32x128xf32>, vector<8x128xf32> -> vector<8x128xf32>
    %cst_40 = arith.constant dense<0.000000e+00> : vector<8x128xf32>
    %183 = tpu.matmul %163, %8, %cst_40 {dimension_numbers = #tpu.dot_dimension_numbers<[1], [0], [0], [1], [0, 0, 1, 1], [], []>} : vector<8x32xf32>, vector<32x128xf32>, vector<8x128xf32> -> vector<8x128xf32>
    %184 = arith.addf %182, %183 : vector<8x128xf32>
    %185 = arith.addf %184, %11 : vector<8x128xf32>
    %186 = arith.negf %185 : vector<8x128xf32>
    %187 = math.exp %186 : vector<8x128xf32>
    %cst_41 = arith.constant 1.000000e+00 : f32
    %188 = vector.broadcast %cst_41 : f32 to vector<8x128xf32>
    %189 = arith.addf %188, %187 : vector<8x128xf32>
    %190 = arith.divf %188, %189 : vector<8x128xf32>
    %191 = math.tanh %185 : vector<8x128xf32>
    %192 = vector.extract_strided_slice %190 {offsets = [0, 0], sizes = [8, 32], strides = [1, 1]} : vector<8x128xf32> to vector<8x32xf32>
    %193 = vector.extract_strided_slice %190 {offsets = [0, 32], sizes = [8, 32], strides = [1, 1]} : vector<8x128xf32> to vector<8x32xf32>
    %194 = vector.extract_strided_slice %191 {offsets = [0, 64], sizes = [8, 32], strides = [1, 1]} : vector<8x128xf32> to vector<8x32xf32>
    %195 = vector.extract_strided_slice %190 {offsets = [0, 96], sizes = [8, 32], strides = [1, 1]} : vector<8x128xf32> to vector<8x32xf32>
    %196 = arith.mulf %193, %161 : vector<8x32xf32>
    %197 = arith.mulf %192, %194 : vector<8x32xf32>
    %198 = arith.addf %196, %197 : vector<8x32xf32>
    %199 = math.tanh %198 : vector<8x32xf32>
    %200 = arith.mulf %195, %199 : vector<8x32xf32>
    %201 = vector.extract_strided_slice %5 {offsets = [40, 0], sizes = [8, 128], strides = [1, 1]} : vector<64x128xf32> to vector<8x128xf32>
    %cst_42 = arith.constant dense<0.000000e+00> : vector<8x128xf32>
    %202 = tpu.matmul %181, %6, %cst_42 {dimension_numbers = #tpu.dot_dimension_numbers<[1], [0], [0], [1], [0, 0, 1, 1], [], []>} : vector<8x32xf32>, vector<32x128xf32>, vector<8x128xf32> -> vector<8x128xf32>
    %203 = arith.addf %201, %202 : vector<8x128xf32>
    %204 = arith.negf %203 : vector<8x128xf32>
    %205 = math.exp %204 : vector<8x128xf32>
    %cst_43 = arith.constant 1.000000e+00 : f32
    %206 = vector.broadcast %cst_43 : f32 to vector<8x128xf32>
    %207 = arith.addf %206, %205 : vector<8x128xf32>
    %208 = arith.divf %206, %207 : vector<8x128xf32>
    %209 = math.tanh %203 : vector<8x128xf32>
    %210 = vector.extract_strided_slice %208 {offsets = [0, 0], sizes = [8, 32], strides = [1, 1]} : vector<8x128xf32> to vector<8x32xf32>
    %211 = vector.extract_strided_slice %208 {offsets = [0, 32], sizes = [8, 32], strides = [1, 1]} : vector<8x128xf32> to vector<8x32xf32>
    %212 = vector.extract_strided_slice %209 {offsets = [0, 64], sizes = [8, 32], strides = [1, 1]} : vector<8x128xf32> to vector<8x32xf32>
    %213 = vector.extract_strided_slice %208 {offsets = [0, 96], sizes = [8, 32], strides = [1, 1]} : vector<8x128xf32> to vector<8x32xf32>
    %214 = arith.mulf %211, %179 : vector<8x32xf32>
    %215 = arith.mulf %210, %212 : vector<8x32xf32>
    %216 = arith.addf %214, %215 : vector<8x32xf32>
    %217 = math.tanh %216 : vector<8x32xf32>
    %218 = arith.mulf %213, %217 : vector<8x32xf32>
    %cst_44 = arith.constant dense<0.000000e+00> : vector<8x128xf32>
    %219 = tpu.matmul %218, %7, %cst_44 {dimension_numbers = #tpu.dot_dimension_numbers<[1], [0], [0], [1], [0, 0, 1, 1], [], []>} : vector<8x32xf32>, vector<32x128xf32>, vector<8x128xf32> -> vector<8x128xf32>
    %cst_45 = arith.constant dense<0.000000e+00> : vector<8x128xf32>
    %220 = tpu.matmul %200, %8, %cst_45 {dimension_numbers = #tpu.dot_dimension_numbers<[1], [0], [0], [1], [0, 0, 1, 1], [], []>} : vector<8x32xf32>, vector<32x128xf32>, vector<8x128xf32> -> vector<8x128xf32>
    %221 = arith.addf %219, %220 : vector<8x128xf32>
    %222 = arith.addf %221, %11 : vector<8x128xf32>
    %223 = arith.negf %222 : vector<8x128xf32>
    %224 = math.exp %223 : vector<8x128xf32>
    %cst_46 = arith.constant 1.000000e+00 : f32
    %225 = vector.broadcast %cst_46 : f32 to vector<8x128xf32>
    %226 = arith.addf %225, %224 : vector<8x128xf32>
    %227 = arith.divf %225, %226 : vector<8x128xf32>
    %228 = math.tanh %222 : vector<8x128xf32>
    %229 = vector.extract_strided_slice %227 {offsets = [0, 0], sizes = [8, 32], strides = [1, 1]} : vector<8x128xf32> to vector<8x32xf32>
    %230 = vector.extract_strided_slice %227 {offsets = [0, 32], sizes = [8, 32], strides = [1, 1]} : vector<8x128xf32> to vector<8x32xf32>
    %231 = vector.extract_strided_slice %228 {offsets = [0, 64], sizes = [8, 32], strides = [1, 1]} : vector<8x128xf32> to vector<8x32xf32>
    %232 = vector.extract_strided_slice %227 {offsets = [0, 96], sizes = [8, 32], strides = [1, 1]} : vector<8x128xf32> to vector<8x32xf32>
    %233 = arith.mulf %230, %198 : vector<8x32xf32>
    %234 = arith.mulf %229, %231 : vector<8x32xf32>
    %235 = arith.addf %233, %234 : vector<8x32xf32>
    %236 = math.tanh %235 : vector<8x32xf32>
    %237 = arith.mulf %232, %236 : vector<8x32xf32>
    %238 = vector.extract_strided_slice %5 {offsets = [48, 0], sizes = [8, 128], strides = [1, 1]} : vector<64x128xf32> to vector<8x128xf32>
    %cst_47 = arith.constant dense<0.000000e+00> : vector<8x128xf32>
    %239 = tpu.matmul %218, %6, %cst_47 {dimension_numbers = #tpu.dot_dimension_numbers<[1], [0], [0], [1], [0, 0, 1, 1], [], []>} : vector<8x32xf32>, vector<32x128xf32>, vector<8x128xf32> -> vector<8x128xf32>
    %240 = arith.addf %238, %239 : vector<8x128xf32>
    %241 = arith.negf %240 : vector<8x128xf32>
    %242 = math.exp %241 : vector<8x128xf32>
    %cst_48 = arith.constant 1.000000e+00 : f32
    %243 = vector.broadcast %cst_48 : f32 to vector<8x128xf32>
    %244 = arith.addf %243, %242 : vector<8x128xf32>
    %245 = arith.divf %243, %244 : vector<8x128xf32>
    %246 = math.tanh %240 : vector<8x128xf32>
    %247 = vector.extract_strided_slice %245 {offsets = [0, 0], sizes = [8, 32], strides = [1, 1]} : vector<8x128xf32> to vector<8x32xf32>
    %248 = vector.extract_strided_slice %245 {offsets = [0, 32], sizes = [8, 32], strides = [1, 1]} : vector<8x128xf32> to vector<8x32xf32>
    %249 = vector.extract_strided_slice %246 {offsets = [0, 64], sizes = [8, 32], strides = [1, 1]} : vector<8x128xf32> to vector<8x32xf32>
    %250 = vector.extract_strided_slice %245 {offsets = [0, 96], sizes = [8, 32], strides = [1, 1]} : vector<8x128xf32> to vector<8x32xf32>
    %251 = arith.mulf %248, %216 : vector<8x32xf32>
    %252 = arith.mulf %247, %249 : vector<8x32xf32>
    %253 = arith.addf %251, %252 : vector<8x32xf32>
    %254 = math.tanh %253 : vector<8x32xf32>
    %255 = arith.mulf %250, %254 : vector<8x32xf32>
    %cst_49 = arith.constant dense<0.000000e+00> : vector<8x128xf32>
    %256 = tpu.matmul %255, %7, %cst_49 {dimension_numbers = #tpu.dot_dimension_numbers<[1], [0], [0], [1], [0, 0, 1, 1], [], []>} : vector<8x32xf32>, vector<32x128xf32>, vector<8x128xf32> -> vector<8x128xf32>
    %cst_50 = arith.constant dense<0.000000e+00> : vector<8x128xf32>
    %257 = tpu.matmul %237, %8, %cst_50 {dimension_numbers = #tpu.dot_dimension_numbers<[1], [0], [0], [1], [0, 0, 1, 1], [], []>} : vector<8x32xf32>, vector<32x128xf32>, vector<8x128xf32> -> vector<8x128xf32>
    %258 = arith.addf %256, %257 : vector<8x128xf32>
    %259 = arith.addf %258, %11 : vector<8x128xf32>
    %260 = arith.negf %259 : vector<8x128xf32>
    %261 = math.exp %260 : vector<8x128xf32>
    %cst_51 = arith.constant 1.000000e+00 : f32
    %262 = vector.broadcast %cst_51 : f32 to vector<8x128xf32>
    %263 = arith.addf %262, %261 : vector<8x128xf32>
    %264 = arith.divf %262, %263 : vector<8x128xf32>
    %265 = math.tanh %259 : vector<8x128xf32>
    %266 = vector.extract_strided_slice %264 {offsets = [0, 0], sizes = [8, 32], strides = [1, 1]} : vector<8x128xf32> to vector<8x32xf32>
    %267 = vector.extract_strided_slice %264 {offsets = [0, 32], sizes = [8, 32], strides = [1, 1]} : vector<8x128xf32> to vector<8x32xf32>
    %268 = vector.extract_strided_slice %265 {offsets = [0, 64], sizes = [8, 32], strides = [1, 1]} : vector<8x128xf32> to vector<8x32xf32>
    %269 = vector.extract_strided_slice %264 {offsets = [0, 96], sizes = [8, 32], strides = [1, 1]} : vector<8x128xf32> to vector<8x32xf32>
    %270 = arith.mulf %267, %235 : vector<8x32xf32>
    %271 = arith.mulf %266, %268 : vector<8x32xf32>
    %272 = arith.addf %270, %271 : vector<8x32xf32>
    %273 = math.tanh %272 : vector<8x32xf32>
    %274 = arith.mulf %269, %273 : vector<8x32xf32>
    %275 = vector.extract_strided_slice %5 {offsets = [56, 0], sizes = [8, 128], strides = [1, 1]} : vector<64x128xf32> to vector<8x128xf32>
    %cst_52 = arith.constant dense<0.000000e+00> : vector<8x128xf32>
    %276 = tpu.matmul %255, %6, %cst_52 {dimension_numbers = #tpu.dot_dimension_numbers<[1], [0], [0], [1], [0, 0, 1, 1], [], []>} : vector<8x32xf32>, vector<32x128xf32>, vector<8x128xf32> -> vector<8x128xf32>
    %277 = arith.addf %275, %276 : vector<8x128xf32>
    %278 = arith.negf %277 : vector<8x128xf32>
    %279 = math.exp %278 : vector<8x128xf32>
    %cst_53 = arith.constant 1.000000e+00 : f32
    %280 = vector.broadcast %cst_53 : f32 to vector<8x128xf32>
    %281 = arith.addf %280, %279 : vector<8x128xf32>
    %282 = arith.divf %280, %281 : vector<8x128xf32>
    %283 = math.tanh %277 : vector<8x128xf32>
    %284 = vector.extract_strided_slice %282 {offsets = [0, 0], sizes = [8, 32], strides = [1, 1]} : vector<8x128xf32> to vector<8x32xf32>
    %285 = vector.extract_strided_slice %282 {offsets = [0, 32], sizes = [8, 32], strides = [1, 1]} : vector<8x128xf32> to vector<8x32xf32>
    %286 = vector.extract_strided_slice %283 {offsets = [0, 64], sizes = [8, 32], strides = [1, 1]} : vector<8x128xf32> to vector<8x32xf32>
    %287 = vector.extract_strided_slice %282 {offsets = [0, 96], sizes = [8, 32], strides = [1, 1]} : vector<8x128xf32> to vector<8x32xf32>
    %288 = arith.mulf %285, %253 : vector<8x32xf32>
    %289 = arith.mulf %284, %286 : vector<8x32xf32>
    %290 = arith.addf %288, %289 : vector<8x32xf32>
    %291 = math.tanh %290 : vector<8x32xf32>
    %292 = arith.mulf %287, %291 : vector<8x32xf32>
    %cst_54 = arith.constant dense<0.000000e+00> : vector<8x128xf32>
    %293 = tpu.matmul %292, %7, %cst_54 {dimension_numbers = #tpu.dot_dimension_numbers<[1], [0], [0], [1], [0, 0, 1, 1], [], []>} : vector<8x32xf32>, vector<32x128xf32>, vector<8x128xf32> -> vector<8x128xf32>
    %cst_55 = arith.constant dense<0.000000e+00> : vector<8x128xf32>
    %294 = tpu.matmul %274, %8, %cst_55 {dimension_numbers = #tpu.dot_dimension_numbers<[1], [0], [0], [1], [0, 0, 1, 1], [], []>} : vector<8x32xf32>, vector<32x128xf32>, vector<8x128xf32> -> vector<8x128xf32>
    %295 = arith.addf %293, %294 : vector<8x128xf32>
    %296 = arith.addf %295, %11 : vector<8x128xf32>
    %297 = arith.negf %296 : vector<8x128xf32>
    %298 = math.exp %297 : vector<8x128xf32>
    %cst_56 = arith.constant 1.000000e+00 : f32
    %299 = vector.broadcast %cst_56 : f32 to vector<8x128xf32>
    %300 = arith.addf %299, %298 : vector<8x128xf32>
    %301 = arith.divf %299, %300 : vector<8x128xf32>
    %302 = math.tanh %296 : vector<8x128xf32>
    %303 = vector.extract_strided_slice %301 {offsets = [0, 0], sizes = [8, 32], strides = [1, 1]} : vector<8x128xf32> to vector<8x32xf32>
    %304 = vector.extract_strided_slice %301 {offsets = [0, 32], sizes = [8, 32], strides = [1, 1]} : vector<8x128xf32> to vector<8x32xf32>
    %305 = vector.extract_strided_slice %302 {offsets = [0, 64], sizes = [8, 32], strides = [1, 1]} : vector<8x128xf32> to vector<8x32xf32>
    %306 = vector.extract_strided_slice %301 {offsets = [0, 96], sizes = [8, 32], strides = [1, 1]} : vector<8x128xf32> to vector<8x32xf32>
    %307 = arith.mulf %304, %272 : vector<8x32xf32>
    %308 = arith.mulf %303, %305 : vector<8x32xf32>
    %309 = arith.addf %307, %308 : vector<8x32xf32>
    %310 = math.tanh %309 : vector<8x32xf32>
    %311 = arith.mulf %306, %310 : vector<8x32xf32>
    %c0_57 = arith.constant 0 : index
    %c0_58 = arith.constant 0 : index
    %312 = vector.load %arg7[%c0_57, %c0_58] : memref<1x32xf32, #tpu.memory_space<vmem>>, vector<1x32xf32>
    %313 = vector.broadcast %312 : vector<1x32xf32> to vector<8x32xf32>
    %314 = arith.mulf %311, %313 : vector<8x32xf32>
    %cst_59 = arith.constant dense<0.000000e+00> : vector<8xf32>
    %315 = vector.multi_reduction <add>, %314, %cst_59 [1] : vector<8x32xf32> to vector<8xf32>
    %316 = vector.shape_cast %315 : vector<8xf32> to vector<8x1xf32>
    %c0_60 = arith.constant 0 : index
    %c0_61 = arith.constant 0 : index
    %317 = vector.load %arg8[%c0_60, %c0_61] : memref<1x1xf32, #tpu.memory_space<vmem>>, vector<1x1xf32>
    %318 = vector.broadcast %317 : vector<1x1xf32> to vector<8x1xf32>
    %319 = arith.addf %316, %318 : vector<8x1xf32>
    %320 = arith.negf %319 : vector<8x1xf32>
    %321 = math.exp %320 : vector<8x1xf32>
    %cst_62 = arith.constant 1.000000e+00 : f32
    %322 = vector.broadcast %cst_62 : f32 to vector<8x1xf32>
    %323 = arith.addf %322, %321 : vector<8x1xf32>
    %324 = arith.divf %322, %323 : vector<8x1xf32>
    %c0_63 = arith.constant 0 : index
    %c0_64 = arith.constant 0 : index
    %325 = vector.load %arg9[%c0_63, %c0_64] : memref<8x1xf32, #tpu.memory_space<vmem>>, vector<8x1xf32>
    tpu.vector_store %arg9[%c0_63, %c0_64], %324 {strides = array<i32>} : memref<8x1xf32, #tpu.memory_space<vmem>>, vector<8x1xf32>,
    return
  }
}

</mosaic_0001>

<llo_original>
// kernel: rnn_classifier_forward.1
$region0: #{rnn_classifier_forward.1}
  #allocation0 [shape = 'u32[]', space=smem, size = 0x4, offset = 0x4, fixed_abs, tag = 'smem constant byte address 0x4 - core index']
  #allocation1 [shape = 'u32[144,128]{1,0:T(1,128)}', space=vmem, size = 0x12000, scoped, tag = 'internal scratch']
  #allocation2 [shape = 'f32[1,1]{1,0:T(1,128)S(1)}', space=vmem, size = 0x200, scoped, tag = 'scoped memory for rnn_classifier_forward.1']
  %s0 = inlined_call_operand.vmem [shape: f32[64,32], index: 0, kind: input, shape index: {}]
  %s1 = inlined_call_operand.vmem [shape: f32[32,128], index: 1, kind: input, shape index: {}]
  %s2 = inlined_call_operand.vmem [shape: f32[32,128], index: 2, kind: input, shape index: {}]
  %s3 = inlined_call_operand.vmem [shape: f32[1,128], index: 3, kind: input, shape index: {}]
  %s4 = inlined_call_operand.vmem [shape: f32[32,128], index: 4, kind: input, shape index: {}]
  %s5 = inlined_call_operand.hbm [shape: f32[32,128], index: 5, kind: input, shape index: {}]
  %s6 = inlined_call_operand.vmem [shape: f32[1,128], index: 6, kind: input, shape index: {}]
  %s7 = inlined_call_operand.vmem [shape: f32[1,32], index: 7, kind: input, shape index: {}]
  %s8 = inlined_call_operand.<no memory space> [shape: f32[1,1], index: 8, kind: input, shape index: {}]
  %s9 = inlined_call_operand.vmem [shape: f32[8,1], index: 9, kind: output, shape index: {}]
  %s10 = sld [smem:[#allocation0]]
  $region50: #{rnn_classifier_forward.1} parent=0
    _
  %s12 = ssub.s32 1, %s10
  %s13 = scalar_select 0, %s12, %s10
  %v14 = vstv %s8
  %15 = vst [vmem:[#allocation2] sm:$0x1] %v14
  $region1: #{rnn_classifier_forward.1} parent=0
    #allocation3 [shape = 'u8[16384]{0}', space=vmem, size = 0x4000, scoped, tag = 'input window, operand 5, single buffered']
    #allocation4 [shape = 's32[1]{0}', space=sflag, size = 0x4, scoped, tag = 'scoped memory for rnn_classifier_forward.1']
    %16 = vsyncpa [#allocation4], 0
    // Predicated region
    $region2: #{rnn_classifier_forward.1} parent=1 // pred_check
      _
    $region3: #{rnn_classifier_forward.1} parent=1 // pred_check_branch
      %18 = sbr.rel (0) target = $region5
    $region4: #{rnn_classifier_forward.1} parent=1 // pred_region
      _
    $region5: #{rnn_classifier_forward.1} parent=1 // pred_fallthru
      _
    // Predicated region
    $region6: #{rnn_classifier_forward.1} parent=1 // pred_check
      _
    $region7: #{rnn_classifier_forward.1} parent=1 // pred_check_branch
      %20 = sbr.rel (0) target = $region9
    $region8: #{rnn_classifier_forward.1} parent=1 // pred_region
      _
    $region9: #{rnn_classifier_forward.1} parent=1 // pred_fallthru
      _
    // Predicated region
    $region10: #{rnn_classifier_forward.1} parent=1 // pred_check
      _
    $region11: #{rnn_classifier_forward.1} parent=1 // pred_check_branch
      %22 = sbr.rel (0) target = $region13
    $region12: #{rnn_classifier_forward.1} parent=1 // pred_region
      _
    $region13: #{rnn_classifier_forward.1} parent=1 // pred_fallthru
      _
    // Predicated region
    $region14: #{rnn_classifier_forward.1} parent=1 // pred_check
      _
    $region15: #{rnn_classifier_forward.1} parent=1 // pred_check_branch
      %24 = sbr.rel (0) target = $region17
    $region16: #{rnn_classifier_forward.1} parent=1 // pred_region
      _
    $region17: #{rnn_classifier_forward.1} parent=1 // pred_fallthru
      _
    // Predicated region
    $region18: #{rnn_classifier_forward.1} parent=1 // pred_check
      _
    $region19: #{rnn_classifier_forward.1} parent=1 // pred_check_branch
      %26 = sbr.rel (0) target = $region21
    $region20: #{rnn_classifier_forward.1} parent=1 // pred_region
      _
    $region21: #{rnn_classifier_forward.1} parent=1 // pred_fallthru
      _
    // Predicated region
    $region22: #{rnn_classifier_forward.1} parent=1 // pred_check
      _
    $region23: #{rnn_classifier_forward.1} parent=1 // pred_check_branch
      %28 = sbr.rel (0) target = $region25
    $region24: #{rnn_classifier_forward.1} parent=1 // pred_region
      %s30 = ssub.s32 512, 512
      %31 = vsyncadd [#allocation4], %s30
      %s32 = sshll.u32 [#allocation3], 4
      %s33 = int_to_ptr.vmem [resolvable:$true] %s32
      %38 = dma.hbm_to_vmem [thread:$0]  %s5, 512, %s33, [#allocation4], 128, 128, 8
    $region25: #{rnn_classifier_forward.1} parent=1 // pred_fallthru
      _
    // Predicated region
    $region26: #{rnn_classifier_forward.1} parent=1 // pred_check
      _
    $region27: #{rnn_classifier_forward.1} parent=1 // pred_check_branch
      %40 = sbr.rel (0) target = $region29
    $region28: #{rnn_classifier_forward.1} parent=1 // pred_region
      _
    $region29: #{rnn_classifier_forward.1} parent=1 // pred_fallthru
      _
    // Predicated region
    $region30: #{rnn_classifier_forward.1} parent=1 // pred_check
      _
    $region31: #{rnn_classifier_forward.1} parent=1 // pred_check_branch
      %42 = sbr.rel (0) target = $region33
    $region32: #{rnn_classifier_forward.1} parent=1 // pred_region
      _
    $region33: #{rnn_classifier_forward.1} parent=1 // pred_fallthru
      _
    // Predicated region
    $region34: #{rnn_classifier_forward.1} parent=1 // pred_check
      _
    $region35: #{rnn_classifier_forward.1} parent=1 // pred_check_branch
      %44 = sbr.rel (0) target = $region37
    $region36: #{rnn_classifier_forward.1} parent=1 // pred_region
      _
    $region37: #{rnn_classifier_forward.1} parent=1 // pred_fallthru
      _
    // Predicated region
    $region38: #{rnn_classifier_forward.1} parent=1 // pred_check
      _
    $region39: #{rnn_classifier_forward.1} parent=1 // pred_check_branch
      %46 = sbr.rel (0) target = $region41
    $region40: #{rnn_classifier_forward.1} parent=1 // pred_region
      %47 = dma.done [#allocation4], 512
    $region41: #{rnn_classifier_forward.1} parent=1 // pred_fallthru
      _
    %v48 = vld [vmem:[%s0] sm:$0xff]
    %v49 = vld [vmem:[%s0 + $0x8] sm:$0xff]
    %v50 = vld [vmem:[%s0 + $0x10] sm:$0xff]
    %v51 = vld [vmem:[%s0 + $0x18] sm:$0xff]
    %v52 = vld [vmem:[%s0 + $0x20] sm:$0xff]
    %v53 = vld [vmem:[%s0 + $0x28] sm:$0xff]
    %v54 = vld [vmem:[%s0 + $0x30] sm:$0xff]
    %v55 = vld [vmem:[%s0 + $0x38] sm:$0xff]
    %v56 = vld [vmem:[%s1] sm:$0xff]
    %v57 = vld [vmem:[%s1 + $0x8] sm:$0xff]
    %v58 = vld [vmem:[%s1 + $0x10] sm:$0xff]
    %v59 = vld [vmem:[%s1 + $0x18] sm:$0xff]
    %v60 = vld [vmem:[%s3] sm:$0x1]
    %v62 = vlaneseq
    %v63 = vshrl.u32 %v62, 7
    %v64 = vsub.s32 0, %v63
    %v65 = vrot.slane %v60, %v64
    %vm67 = vcmask 261120
    %v69 = vsel %vm67, %v48, 0
    %v72 = vsel %vm67, %v49, 0
    %v75 = vsel %vm67, %v50, 0
    %v78 = vsel %vm67, %v51, 0
    %v81 = vsel %vm67, %v52, 0
    %v84 = vsel %vm67, %v53, 0
    %v87 = vsel %vm67, %v54, 0
    %v90 = vsel %vm67, %v55, 0
    %92 = vmatprep.subr.mxu0 0.0
    %93 = vmatpush1.msra.mxu0 0.0
    %94 = vmatprep.subr.mxu0 0.0
    %95 = vmatpush1.msra.mxu0 0.0
    %96 = vmatprep.subr.mxu0 0.0
    %97 = vmatpush1.msra.mxu0 0.0
    %98 = vmatprep.subr.mxu0 0.0
    %99 = vmatpush1.msra.mxu0 0.0
    %100 = vmatprep.subr.mxu0 0.0
    %101 = vmatpush1.msra.mxu0 0.0
    %102 = vmatprep.subr.mxu0 0.0
    %103 = vmatpush1.msra.mxu0 0.0
    %104 = vmatprep.subr.mxu0 0.0
    %105 = vmatpush1.msra.mxu0 0.0
    %106 = vmatprep.subr.mxu0 0.0
    %107 = vmatpush1.msra.mxu0 0.0
    %108 = vmatprep.subr.mxu0 0.0
    %109 = vmatpush1.msra.mxu0 0.0
    %110 = vmatprep.subr.mxu0 0.0
    %111 = vmatpush1.msra.mxu0 0.0
    %112 = vmatprep.subr.mxu0 0.0
    %113 = vmatpush1.msra.mxu0 0.0
    %114 = vmatprep.subr.mxu0 0.0
    %115 = vmatpush1.msra.mxu0 0.0
    %116 = vmatprep.subr.mxu0 0.0
    %117 = vmatpush1.msra.mxu0 %v59
    %118 = vmatprep.subr.mxu0 0.0
    %119 = vmatpush1.msra.mxu0 %v58
    %120 = vmatprep.subr.mxu0 0.0
    %121 = vmatpush1.msra.mxu0 %v57
    %122 = vmatprep.subr.mxu0 0.0
    %123 = vmatpush1.msra.mxu0 %v56
    %124 = vmatprep.subr.mxu0 0.0
    %125 = vmatpush2.msra.mxu0 0.0
    %126 = vmatprep.subr.mxu0 0.0
    %127 = vmatpush2.msra.mxu0 0.0
    %128 = vmatprep.subr.mxu0 0.0
    %129 = vmatpush2.msra.mxu0 0.0
    %130 = vmatprep.subr.mxu0 0.0
    %131 = vmatpush2.msra.mxu0 0.0
    %132 = vmatprep.subr.mxu0 0.0
    %133 = vmatpush2.msra.mxu0 0.0
    %134 = vmatprep.subr.mxu0 0.0
    %135 = vmatpush2.msra.mxu0 0.0
    %136 = vmatprep.subr.mxu0 0.0
    %137 = vmatpush2.msra.mxu0 0.0
    %138 = vmatprep.subr.mxu0 0.0
    %139 = vmatpush2.msra.mxu0 0.0
    %140 = vmatprep.subr.mxu0 0.0
    %141 = vmatpush2.msra.mxu0 0.0
    %142 = vmatprep.subr.mxu0 0.0
    %143 = vmatpush2.msra.mxu0 0.0
    %144 = vmatprep.subr.mxu0 0.0
    %145 = vmatpush2.msra.mxu0 0.0
    %146 = vmatprep.subr.mxu0 0.0
    %147 = vmatpush2.msra.mxu0 0.0
    %148 = vmatprep.subr.mxu0 0.0
    %149 = vmatpush2.msra.mxu0 0.0
    %150 = vmatprep.subr.mxu0 0.0
    %151 = vmatpush2.msra.mxu0 0.0
    %152 = vmatprep.subr.mxu0 0.0
    %153 = vmatpush2.msra.mxu0 0.0
    %154 = vmatprep.subr.mxu0 0.0
    %155 = vmatpush2.msra.mxu0 0.0
    %156 = vmatprep.mubr.f32.mxu0 0.0
    %157 = vmatmul.mubr.f32.gmra.mxu0 %v69
    %v158 = vpop.f32.mrf.mxu0
    %v159 = vadd.f32 %v65, %v158
    %v160 = vpop.f32.mrf.mxu0
    %161 = vmatprep.mubr.f32.mxu0 0.0
    %162 = vmatmul.mubr.f32.gmra.mxu0 %v72
    %v163 = vpop.f32.mrf.mxu0
    %v164 = vadd.f32 %v65, %v163
    %v165 = vpop.f32.mrf.mxu0
    %166 = vmatprep.mubr.f32.mxu0 0.0
    %167 = vmatmul.mubr.f32.gmra.mxu0 %v75
    %v168 = vpop.f32.mrf.mxu0
    %v169 = vadd.f32 %v65, %v168
    %v170 = vpop.f32.mrf.mxu0
    %171 = vmatprep.mubr.f32.mxu0 0.0
    %172 = vmatmul.mubr.f32.gmra.mxu0 %v78
    %v173 = vpop.f32.mrf.mxu0
    %v174 = vadd.f32 %v65, %v173
    %v175 = vpop.f32.mrf.mxu0
    %176 = vmatprep.mubr.f32.mxu0 0.0
    %177 = vmatmul.mubr.f32.gmra.mxu0 %v81
    %v178 = vpop.f32.mrf.mxu0
    %v179 = vadd.f32 %v65, %v178
    %v180 = vpop.f32.mrf.mxu0
    %181 = vmatprep.mubr.f32.mxu0 0.0
    %182 = vmatmul.mubr.f32.gmra.mxu0 %v84
    %v183 = vpop.f32.mrf.mxu0
    %v184 = vadd.f32 %v65, %v183
    %v185 = vpop.f32.mrf.mxu0
    %186 = vmatprep.mubr.f32.mxu0 0.0
    %187 = vmatmul.mubr.f32.gmra.mxu0 %v87
    %v188 = vpop.f32.mrf.mxu0
    %v189 = vadd.f32 %v65, %v188
    %v190 = vpop.f32.mrf.mxu0
    %191 = vmatprep.mubr.f32.mxu0 0.0
    %192 = vmatmul.mubr.f32.gmra.mxu0 %v90
    %v193 = vpop.f32.mrf.mxu0
    %v194 = vadd.f32 %v65, %v193
    %v195 = vpop.f32.mrf.mxu0
    %196 = vdwg.mxu0
    %v197 = vld [vmem:[%s2] sm:$0xff]
    %v198 = vld [vmem:[%s2 + $0x8] sm:$0xff]
    %v199 = vld [vmem:[%s2 + $0x10] sm:$0xff]
    %v200 = vld [vmem:[%s2 + $0x18] sm:$0xff]
    %v201 = vld [vmem:[%s4] sm:$0xff]
    %v202 = vld [vmem:[%s4 + $0x8] sm:$0xff]
    %v203 = vld [vmem:[%s4 + $0x10] sm:$0xff]
    %v204 = vld [vmem:[%s4 + $0x18] sm:$0xff]
    %v205 = vld [vmem:[#allocation3] sm:$0xff]
    %v206 = vld [vmem:[#allocation3 + $0x8] sm:$0xff]
    %v207 = vld [vmem:[#allocation3 + $0x10] sm:$0xff]
    %v208 = vld [vmem:[#allocation3 + $0x18] sm:$0xff]
    %v209 = vld [vmem:[%s6] sm:$0x1]
    %v211 = vlaneseq
    %v212 = vshrl.u32 %v211, 7
    %v213 = vsub.s32 0, %v212
    %v214 = vrot.slane %v209, %v213
    %v217 = vsel %vm67, 0.0, 0
    %219 = vmatprep.subr.mxu0 0.0
    %220 = vmatpush1.msra.mxu0 0.0
    %221 = vmatprep.subr.mxu0 0.0
    %222 = vmatpush1.msra.mxu0 0.0
    %223 = vmatprep.subr.mxu0 0.0
    %224 = vmatpush1.msra.mxu0 0.0
    %225 = vmatprep.subr.mxu0 0.0
    %226 = vmatpush1.msra.mxu0 0.0
    %227 = vmatprep.subr.mxu0 0.0
    %228 = vmatpush1.msra.mxu0 0.0
    %229 = vmatprep.subr.mxu0 0.0
    %230 = vmatpush1.msra.mxu0 0.0
    %231 = vmatprep.subr.mxu0 0.0
    %232 = vmatpush1.msra.mxu0 0.0
    %233 = vmatprep.subr.mxu0 0.0
    %234 = vmatpush1.msra.mxu0 0.0
    %235 = vmatprep.subr.mxu0 0.0
    %236 = vmatpush1.msra.mxu0 0.0
    %237 = vmatprep.subr.mxu0 0.0
    %238 = vmatpush1.msra.mxu0 0.0
    %239 = vmatprep.subr.mxu0 0.0
    %240 = vmatpush1.msra.mxu0 0.0
    %241 = vmatprep.subr.mxu0 0.0
    %242 = vmatpush1.msra.mxu0 0.0
    %243 = vmatprep.subr.mxu0 0.0
    %244 = vmatpush1.msra.mxu0 %v200
    %245 = vmatprep.subr.mxu0 0.0
    %246 = vmatpush1.msra.mxu0 %v199
    %247 = vmatprep.subr.mxu0 0.0
    %248 = vmatpush1.msra.mxu0 %v198
    %249 = vmatprep.subr.mxu0 0.0
    %250 = vmatpush1.msra.mxu0 %v197
    %251 = vmatprep.subr.mxu0 0.0
    %252 = vmatpush2.msra.mxu0 0.0
    %253 = vmatprep.subr.mxu0 0.0
    %254 = vmatpush2.msra.mxu0 0.0
    %255 = vmatprep.subr.mxu0 0.0
    %256 = vmatpush2.msra.mxu0 0.0
    %257 = vmatprep.subr.mxu0 0.0
    %258 = vmatpush2.msra.mxu0 0.0
    %259 = vmatprep.subr.mxu0 0.0
    %260 = vmatpush2.msra.mxu0 0.0
    %261 = vmatprep.subr.mxu0 0.0
    %262 = vmatpush2.msra.mxu0 0.0
    %263 = vmatprep.subr.mxu0 0.0
    %264 = vmatpush2.msra.mxu0 0.0
    %265 = vmatprep.subr.mxu0 0.0
    %266 = vmatpush2.msra.mxu0 0.0
    %267 = vmatprep.subr.mxu0 0.0
    %268 = vmatpush2.msra.mxu0 0.0
    %269 = vmatprep.subr.mxu0 0.0
    %270 = vmatpush2.msra.mxu0 0.0
    %271 = vmatprep.subr.mxu0 0.0
    %272 = vmatpush2.msra.mxu0 0.0
    %273 = vmatprep.subr.mxu0 0.0
    %274 = vmatpush2.msra.mxu0 0.0
    %275 = vmatprep.subr.mxu0 0.0
    %276 = vmatpush2.msra.mxu0 0.0
    %277 = vmatprep.subr.mxu0 0.0
    %278 = vmatpush2.msra.mxu0 0.0
    %279 = vmatprep.subr.mxu0 0.0
    %280 = vmatpush2.msra.mxu0 0.0
    %281 = vmatprep.subr.mxu0 0.0
    %282 = vmatpush2.msra.mxu0 0.0
    %283 = vmatprep.mubr.f32.mxu0 0.0
    %284 = vmatmul.mubr.f32.gmra.mxu0 %v217
    %v285 = vpop.f32.mrf.mxu0
    %v286 = vadd.f32 0.0, %v285
    %v287 = vpop.f32.mrf.mxu0
    %288 = vdwg.mxu0
    %v289 = vadd.f32 %v159, %v286
    %v290 = vxor.u32 %v289, 2147483648
    %v291 = vmul.f32 %v290, 1.442695
    %v292 = vpow.pop %v291
    %v293 = vadd.f32 %v292, 1.0
    %v294 = vrcp.pop %v293
    %v295 = vmul.f32 1.0, %v294
    %v296 = vtanh.pop %v289
    %v297 = vmul.f32 %v295, 0.0
    %299 = vrot.lane.b32.xlu0 %v296, 64
    %v300 = vpop.permute.xlu0 %299
    %v302 = vmul.f32 %v295, %v300
    %304 = vrot.lane.b32.xlu0 %v302, 32
    %v305 = vpop.permute.xlu0 %304
    %v307 = vadd.f32 %v297, %v305
    %v308 = vtanh.pop %v307
    %310 = vrot.lane.b32.xlu0 %v308, 64
    %v311 = vpop.permute.xlu0 %310
    %v313 = vmul.f32 %v295, %v311
    %314 = vmatprep.subr.mxu0 0.0
    %315 = vmatpush1.msra.mxu0 0.0
    %316 = vmatprep.subr.mxu0 0.0
    %317 = vmatpush1.msra.mxu0 0.0
    %318 = vmatprep.subr.mxu0 0.0
    %319 = vmatpush1.msra.mxu0 0.0
    %320 = vmatprep.subr.mxu0 0.0
    %321 = vmatpush1.msra.mxu0 0.0
    %322 = vmatprep.subr.mxu0 0.0
    %323 = vmatpush1.msra.mxu0 0.0
    %324 = vmatprep.subr.mxu0 0.0
    %325 = vmatpush1.msra.mxu0 0.0
    %326 = vmatprep.subr.mxu0 0.0
    %327 = vmatpush1.msra.mxu0 0.0
    %328 = vmatprep.subr.mxu0 0.0
    %329 = vmatpush1.msra.mxu0 0.0
    %330 = vmatprep.subr.mxu0 0.0
    %331 = vmatpush1.msra.mxu0 0.0
    %332 = vmatprep.subr.mxu0 0.0
    %333 = vmatpush1.msra.mxu0 0.0
    %334 = vmatprep.subr.mxu0 0.0
    %335 = vmatpush1.msra.mxu0 0.0
    %336 = vmatprep.subr.mxu0 0.0
    %337 = vmatpush1.msra.mxu0 0.0
    %338 = vmatprep.subr.mxu0 0.0
    %339 = vmatpush1.msra.mxu0 %v208
    %340 = vmatprep.subr.mxu0 0.0
    %341 = vmatpush1.msra.mxu0 %v207
    %342 = vmatprep.subr.mxu0 0.0
    %343 = vmatpush1.msra.mxu0 %v206
    %344 = vmatprep.subr.mxu0 0.0
    %345 = vmatpush1.msra.mxu0 %v205
    %346 = vmatprep.subr.mxu0 0.0
    %347 = vmatpush2.msra.mxu0 0.0
    %348 = vmatprep.subr.mxu0 0.0
    %349 = vmatpush2.msra.mxu0 0.0
    %350 = vmatprep.subr.mxu0 0.0
    %351 = vmatpush2.msra.mxu0 0.0
    %352 = vmatprep.subr.mxu0 0.0
    %353 = vmatpush2.msra.mxu0 0.0
    %354 = vmatprep.subr.mxu0 0.0
    %355 = vmatpush2.msra.mxu0 0.0
    %356 = vmatprep.subr.mxu0 0.0
    %357 = vmatpush2.msra.mxu0 0.0
    %358 = vmatprep.subr.mxu0 0.0
    %359 = vmatpush2.msra.mxu0 0.0
    %360 = vmatprep.subr.mxu0 0.0
    %361 = vmatpush2.msra.mxu0 0.0
    %362 = vmatprep.subr.mxu0 0.0
    %363 = vmatpush2.msra.mxu0 0.0
    %364 = vmatprep.subr.mxu0 0.0
    %365 = vmatpush2.msra.mxu0 0.0
    %366 = vmatprep.subr.mxu0 0.0
    %367 = vmatpush2.msra.mxu0 0.0
    %368 = vmatprep.subr.mxu0 0.0
    %369 = vmatpush2.msra.mxu0 0.0
    %370 = vmatprep.subr.mxu0 0.0
    %371 = vmatpush2.msra.mxu0 0.0
    %372 = vmatprep.subr.mxu0 0.0
    %373 = vmatpush2.msra.mxu0 0.0
    %374 = vmatprep.subr.mxu0 0.0
    %375 = vmatpush2.msra.mxu0 0.0
    %376 = vmatprep.subr.mxu0 0.0
    %377 = vmatpush2.msra.mxu0 0.0
    %378 = vmatprep.mubr.f32.mxu0 0.0
    %379 = vmatmul.mubr.f32.gmra.mxu0 %v217
    %v380 = vpop.f32.mrf.mxu0
    %v381 = vadd.f32 0.0, %v380
    %v382 = vpop.f32.mrf.mxu0
    %383 = vdwg.mxu0
    %385 = vrot.lane.b32.xlu0 %v313, 32
    %v386 = vpop.permute.xlu0 %385
    %v387 = vsel %vm67, %v386, 0
    %389 = vmatprep.subr.mxu0 0.0
    %390 = vmatpush1.msra.mxu0 0.0
    %391 = vmatprep.subr.mxu0 0.0
    %392 = vmatpush1.msra.mxu0 0.0
    %393 = vmatprep.subr.mxu0 0.0
    %394 = vmatpush1.msra.mxu0 0.0
    %395 = vmatprep.subr.mxu0 0.0
    %396 = vmatpush1.msra.mxu0 0.0
    %397 = vmatprep.subr.mxu0 0.0
    %398 = vmatpush1.msra.mxu0 0.0
    %399 = vmatprep.subr.mxu0 0.0
    %400 = vmatpush1.msra.mxu0 0.0
    %401 = vmatprep.subr.mxu0 0.0
    %402 = vmatpush1.msra.mxu0 0.0
    %403 = vmatprep.subr.mxu0 0.0
    %404 = vmatpush1.msra.mxu0 0.0
    %405 = vmatprep.subr.mxu0 0.0
    %406 = vmatpush1.msra.mxu0 0.0
    %407 = vmatprep.subr.mxu0 0.0
    %408 = vmatpush1.msra.mxu0 0.0
    %409 = vmatprep.subr.mxu0 0.0
    %410 = vmatpush1.msra.mxu0 0.0
    %411 = vmatprep.subr.mxu0 0.0
    %412 = vmatpush1.msra.mxu0 0.0
    %413 = vmatprep.subr.mxu0 0.0
    %414 = vmatpush1.msra.mxu0 %v204
    %415 = vmatprep.subr.mxu0 0.0
    %416 = vmatpush1.msra.mxu0 %v203
    %417 = vmatprep.subr.mxu0 0.0
    %418 = vmatpush1.msra.mxu0 %v202
    %419 = vmatprep.subr.mxu0 0.0
    %420 = vmatpush1.msra.mxu0 %v201
    %421 = vmatprep.subr.mxu0 0.0
    %422 = vmatpush2.msra.mxu0 0.0
    %423 = vmatprep.subr.mxu0 0.0
    %424 = vmatpush2.msra.mxu0 0.0
    %425 = vmatprep.subr.mxu0 0.0
    %426 = vmatpush2.msra.mxu0 0.0
    %427 = vmatprep.subr.mxu0 0.0
    %428 = vmatpush2.msra.mxu0 0.0
    %429 = vmatprep.subr.mxu0 0.0
    %430 = vmatpush2.msra.mxu0 0.0
    %431 = vmatprep.subr.mxu0 0.0
    %432 = vmatpush2.msra.mxu0 0.0
    %433 = vmatprep.subr.mxu0 0.0
    %434 = vmatpush2.msra.mxu0 0.0
    %435 = vmatprep.subr.mxu0 0.0
    %436 = vmatpush2.msra.mxu0 0.0
    %437 = vmatprep.subr.mxu0 0.0
    %438 = vmatpush2.msra.mxu0 0.0
    %439 = vmatprep.subr.mxu0 0.0
    %440 = vmatpush2.msra.mxu0 0.0
    %441 = vmatprep.subr.mxu0 0.0
    %442 = vmatpush2.msra.mxu0 0.0
    %443 = vmatprep.subr.mxu0 0.0
    %444 = vmatpush2.msra.mxu0 0.0
    %445 = vmatprep.subr.mxu0 0.0
    %446 = vmatpush2.msra.mxu0 0.0
    %447 = vmatprep.subr.mxu0 0.0
    %448 = vmatpush2.msra.mxu0 0.0
    %449 = vmatprep.subr.mxu0 0.0
    %450 = vmatpush2.msra.mxu0 0.0
    %451 = vmatprep.subr.mxu0 0.0
    %452 = vmatpush2.msra.mxu0 0.0
    %453 = vmatprep.mubr.f32.mxu0 0.0
    %454 = vmatmul.mubr.f32.gmra.mxu0 %v387
    %v455 = vpop.f32.mrf.mxu0
    %v456 = vadd.f32 %v381, %v455
    %v457 = vpop.f32.mrf.mxu0
    %458 = vdwg.mxu0
    %v459 = vadd.f32 %v456, %v214
    %v460 = vxor.u32 %v459, 2147483648
    %v461 = vmul.f32 %v460, 1.442695
    %v462 = vpow.pop %v461
    %v463 = vadd.f32 %v462, 1.0
    %v464 = vrcp.pop %v463
    %v465 = vmul.f32 1.0, %v464
    %v466 = vtanh.pop %v459
    %v467 = vmul.f32 %v465, 0.0
    %469 = vrot.lane.b32.xlu0 %v466, 64
    %v470 = vpop.permute.xlu0 %469
    %v472 = vmul.f32 %v465, %v470
    %474 = vrot.lane.b32.xlu0 %v472, 32
    %v475 = vpop.permute.xlu0 %474
    %v477 = vadd.f32 %v467, %v475
    %v478 = vtanh.pop %v477
    %480 = vrot.lane.b32.xlu0 %v478, 64
    %v481 = vpop.permute.xlu0 %480
    %v483 = vmul.f32 %v465, %v481
    %484 = vmatprep.subr.mxu0 0.0
    %485 = vmatpush1.msra.mxu0 0.0
    %486 = vmatprep.subr.mxu0 0.0
    %487 = vmatpush1.msra.mxu0 0.0
    %488 = vmatprep.subr.mxu0 0.0
    %489 = vmatpush1.msra.mxu0 0.0
    %490 = vmatprep.subr.mxu0 0.0
    %491 = vmatpush1.msra.mxu0 0.0
    %492 = vmatprep.subr.mxu0 0.0
    %493 = vmatpush1.msra.mxu0 0.0
    %494 = vmatprep.subr.mxu0 0.0
    %495 = vmatpush1.msra.mxu0 0.0
    %496 = vmatprep.subr.mxu0 0.0
    %497 = vmatpush1.msra.mxu0 0.0
    %498 = vmatprep.subr.mxu0 0.0
    %499 = vmatpush1.msra.mxu0 0.0
    %500 = vmatprep.subr.mxu0 0.0
    %501 = vmatpush1.msra.mxu0 0.0
    %502 = vmatprep.subr.mxu0 0.0
    %503 = vmatpush1.msra.mxu0 0.0
    %504 = vmatprep.subr.mxu0 0.0
    %505 = vmatpush1.msra.mxu0 0.0
    %506 = vmatprep.subr.mxu0 0.0
    %507 = vmatpush1.msra.mxu0 0.0
    %508 = vmatprep.subr.mxu0 0.0
    %509 = vmatpush1.msra.mxu0 %v200
    %510 = vmatprep.subr.mxu0 0.0
    %511 = vmatpush1.msra.mxu0 %v199
    %512 = vmatprep.subr.mxu0 0.0
    %513 = vmatpush1.msra.mxu0 %v198
    %514 = vmatprep.subr.mxu0 0.0
    %515 = vmatpush1.msra.mxu0 %v197
    %516 = vmatprep.subr.mxu0 0.0
    %517 = vmatpush2.msra.mxu0 0.0
    %518 = vmatprep.subr.mxu0 0.0
    %519 = vmatpush2.msra.mxu0 0.0
    %520 = vmatprep.subr.mxu0 0.0
    %521 = vmatpush2.msra.mxu0 0.0
    %522 = vmatprep.subr.mxu0 0.0
    %523 = vmatpush2.msra.mxu0 0.0
    %524 = vmatprep.subr.mxu0 0.0
    %525 = vmatpush2.msra.mxu0 0.0
    %526 = vmatprep.subr.mxu0 0.0
    %527 = vmatpush2.msra.mxu0 0.0
    %528 = vmatprep.subr.mxu0 0.0
    %529 = vmatpush2.msra.mxu0 0.0
    %530 = vmatprep.subr.mxu0 0.0
    %531 = vmatpush2.msra.mxu0 0.0
    %532 = vmatprep.subr.mxu0 0.0
    %533 = vmatpush2.msra.mxu0 0.0
    %534 = vmatprep.subr.mxu0 0.0
    %535 = vmatpush2.msra.mxu0 0.0
    %536 = vmatprep.subr.mxu0 0.0
    %537 = vmatpush2.msra.mxu0 0.0
    %538 = vmatprep.subr.mxu0 0.0
    %539 = vmatpush2.msra.mxu0 0.0
    %540 = vmatprep.subr.mxu0 0.0
    %541 = vmatpush2.msra.mxu0 0.0
    %542 = vmatprep.subr.mxu0 0.0
    %543 = vmatpush2.msra.mxu0 0.0
    %544 = vmatprep.subr.mxu0 0.0
    %545 = vmatpush2.msra.mxu0 0.0
    %546 = vmatprep.subr.mxu0 0.0
    %547 = vmatpush2.msra.mxu0 0.0
    %548 = vmatprep.mubr.f32.mxu0 0.0
    %549 = vmatmul.mubr.f32.gmra.mxu0 %v387
    %v550 = vpop.f32.mrf.mxu0
    %v551 = vadd.f32 0.0, %v550
    %v552 = vpop.f32.mrf.mxu0
    %553 = vdwg.mxu0
    %v554 = vadd.f32 %v164, %v551
    %v555 = vxor.u32 %v554, 2147483648
    %v556 = vmul.f32 %v555, 1.442695
    %v557 = vpow.pop %v556
    %v558 = vadd.f32 %v557, 1.0
    %v559 = vrcp.pop %v558
    %v560 = vmul.f32 1.0, %v559
    %v561 = vtanh.pop %v554
    %v562 = vmul.f32 %v560, %v307
    %564 = vrot.lane.b32.xlu0 %v561, 64
    %v565 = vpop.permute.xlu0 %564
    %v567 = vmul.f32 %v560, %v565
    %569 = vrot.lane.b32.xlu0 %v567, 32
    %v570 = vpop.permute.xlu0 %569
    %v572 = vadd.f32 %v562, %v570
    %v573 = vtanh.pop %v572
    %575 = vrot.lane.b32.xlu0 %v573, 64
    %v576 = vpop.permute.xlu0 %575
    %v578 = vmul.f32 %v560, %v576
    %580 = vrot.lane.b32.xlu0 %v483, 32
    %v581 = vpop.permute.xlu0 %580
    %v582 = vsel %vm67, %v581, 0
    %584 = vmatprep.subr.mxu0 0.0
    %585 = vmatpush1.msra.mxu0 0.0
    %586 = vmatprep.subr.mxu0 0.0
    %587 = vmatpush1.msra.mxu0 0.0
    %588 = vmatprep.subr.mxu0 0.0
    %589 = vmatpush1.msra.mxu0 0.0
    %590 = vmatprep.subr.mxu0 0.0
    %591 = vmatpush1.msra.mxu0 0.0
    %592 = vmatprep.subr.mxu0 0.0
    %593 = vmatpush1.msra.mxu0 0.0
    %594 = vmatprep.subr.mxu0 0.0
    %595 = vmatpush1.msra.mxu0 0.0
    %596 = vmatprep.subr.mxu0 0.0
    %597 = vmatpush1.msra.mxu0 0.0
    %598 = vmatprep.subr.mxu0 0.0
    %599 = vmatpush1.msra.mxu0 0.0
    %600 = vmatprep.subr.mxu0 0.0
    %601 = vmatpush1.msra.mxu0 0.0
    %602 = vmatprep.subr.mxu0 0.0
    %603 = vmatpush1.msra.mxu0 0.0
    %604 = vmatprep.subr.mxu0 0.0
    %605 = vmatpush1.msra.mxu0 0.0
    %606 = vmatprep.subr.mxu0 0.0
    %607 = vmatpush1.msra.mxu0 0.0
    %608 = vmatprep.subr.mxu0 0.0
    %609 = vmatpush1.msra.mxu0 %v208
    %610 = vmatprep.subr.mxu0 0.0
    %611 = vmatpush1.msra.mxu0 %v207
    %612 = vmatprep.subr.mxu0 0.0
    %613 = vmatpush1.msra.mxu0 %v206
    %614 = vmatprep.subr.mxu0 0.0
    %615 = vmatpush1.msra.mxu0 %v205
    %616 = vmatprep.subr.mxu0 0.0
    %617 = vmatpush2.msra.mxu0 0.0
    %618 = vmatprep.subr.mxu0 0.0
    %619 = vmatpush2.msra.mxu0 0.0
    %620 = vmatprep.subr.mxu0 0.0
    %621 = vmatpush2.msra.mxu0 0.0
    %622 = vmatprep.subr.mxu0 0.0
    %623 = vmatpush2.msra.mxu0 0.0
    %624 = vmatprep.subr.mxu0 0.0
    %625 = vmatpush2.msra.mxu0 0.0
    %626 = vmatprep.subr.mxu0 0.0
    %627 = vmatpush2.msra.mxu0 0.0
    %628 = vmatprep.subr.mxu0 0.0
    %629 = vmatpush2.msra.mxu0 0.0
    %630 = vmatprep.subr.mxu0 0.0
    %631 = vmatpush2.msra.mxu0 0.0
    %632 = vmatprep.subr.mxu0 0.0
    %633 = vmatpush2.msra.mxu0 0.0
    %634 = vmatprep.subr.mxu0 0.0
    %635 = vmatpush2.msra.mxu0 0.0
    %636 = vmatprep.subr.mxu0 0.0
    %637 = vmatpush2.msra.mxu0 0.0
    %638 = vmatprep.subr.mxu0 0.0
    %639 = vmatpush2.msra.mxu0 0.0
    %640 = vmatprep.subr.mxu0 0.0
    %641 = vmatpush2.msra.mxu0 0.0
    %642 = vmatprep.subr.mxu0 0.0
    %643 = vmatpush2.msra.mxu0 0.0
    %644 = vmatprep.subr.mxu0 0.0
    %645 = vmatpush2.msra.mxu0 0.0
    %646 = vmatprep.subr.mxu0 0.0
    %647 = vmatpush2.msra.mxu0 0.0
    %648 = vmatprep.mubr.f32.mxu0 0.0
    %649 = vmatmul.mubr.f32.gmra.mxu0 %v582
    %v650 = vpop.f32.mrf.mxu0
    %v651 = vadd.f32 0.0, %v650
    %v652 = vpop.f32.mrf.mxu0
    %653 = vdwg.mxu0
    %655 = vrot.lane.b32.xlu0 %v578, 32
    %v656 = vpop.permute.xlu0 %655
    %v657 = vsel %vm67, %v656, 0
    %659 = vmatprep.subr.mxu0 0.0
    %660 = vmatpush1.msra.mxu0 0.0
    %661 = vmatprep.subr.mxu0 0.0
    %662 = vmatpush1.msra.mxu0 0.0
    %663 = vmatprep.subr.mxu0 0.0
    %664 = vmatpush1.msra.mxu0 0.0
    %665 = vmatprep.subr.mxu0 0.0
    %666 = vmatpush1.msra.mxu0 0.0
    %667 = vmatprep.subr.mxu0 0.0
    %668 = vmatpush1.msra.mxu0 0.0
    %669 = vmatprep.subr.mxu0 0.0
    %670 = vmatpush1.msra.mxu0 0.0
    %671 = vmatprep.subr.mxu0 0.0
    %672 = vmatpush1.msra.mxu0 0.0
    %673 = vmatprep.subr.mxu0 0.0
    %674 = vmatpush1.msra.mxu0 0.0
    %675 = vmatprep.subr.mxu0 0.0
    %676 = vmatpush1.msra.mxu0 0.0
    %677 = vmatprep.subr.mxu0 0.0
    %678 = vmatpush1.msra.mxu0 0.0
    %679 = vmatprep.subr.mxu0 0.0
    %680 = vmatpush1.msra.mxu0 0.0
    %681 = vmatprep.subr.mxu0 0.0
    %682 = vmatpush1.msra.mxu0 0.0
    %683 = vmatprep.subr.mxu0 0.0
    %684 = vmatpush1.msra.mxu0 %v204
    %685 = vmatprep.subr.mxu0 0.0
    %686 = vmatpush1.msra.mxu0 %v203
    %687 = vmatprep.subr.mxu0 0.0
    %688 = vmatpush1.msra.mxu0 %v202
    %689 = vmatprep.subr.mxu0 0.0
    %690 = vmatpush1.msra.mxu0 %v201
    %691 = vmatprep.subr.mxu0 0.0
    %692 = vmatpush2.msra.mxu0 0.0
    %693 = vmatprep.subr.mxu0 0.0
    %694 = vmatpush2.msra.mxu0 0.0
    %695 = vmatprep.subr.mxu0 0.0
    %696 = vmatpush2.msra.mxu0 0.0
    %697 = vmatprep.subr.mxu0 0.0
    %698 = vmatpush2.msra.mxu0 0.0
    %699 = vmatprep.subr.mxu0 0.0
    %700 = vmatpush2.msra.mxu0 0.0
    %701 = vmatprep.subr.mxu0 0.0
    %702 = vmatpush2.msra.mxu0 0.0
    %703 = vmatprep.subr.mxu0 0.0
    %704 = vmatpush2.msra.mxu0 0.0
    %705 = vmatprep.subr.mxu0 0.0
    %706 = vmatpush2.msra.mxu0 0.0
    %707 = vmatprep.subr.mxu0 0.0
    %708 = vmatpush2.msra.mxu0 0.0
    %709 = vmatprep.subr.mxu0 0.0
    %710 = vmatpush2.msra.mxu0 0.0
    %711 = vmatprep.subr.mxu0 0.0
    %712 = vmatpush2.msra.mxu0 0.0
    %713 = vmatprep.subr.mxu0 0.0
    %714 = vmatpush2.msra.mxu0 0.0
    %715 = vmatprep.subr.mxu0 0.0
    %716 = vmatpush2.msra.mxu0 0.0
    %717 = vmatprep.subr.mxu0 0.0
    %718 = vmatpush2.msra.mxu0 0.0
    %719 = vmatprep.subr.mxu0 0.0
    %720 = vmatpush2.msra.mxu0 0.0
    %721 = vmatprep.subr.mxu0 0.0
    %722 = vmatpush2.msra.mxu0 0.0
    %723 = vmatprep.mubr.f32.mxu0 0.0
    %724 = vmatmul.mubr.f32.gmra.mxu0 %v657
    %v725 = vpop.f32.mrf.mxu0
    %v726 = vadd.f32 %v651, %v725
    %v727 = vpop.f32.mrf.mxu0
    %728 = vdwg.mxu0
    %v729 = vadd.f32 %v726, %v214
    %v730 = vxor.u32 %v729, 2147483648
    %v731 = vmul.f32 %v730, 1.442695
    %v732 = vpow.pop %v731
    %v733 = vadd.f32 %v732, 1.0
    %v734 = vrcp.pop %v733
    %v735 = vmul.f32 1.0, %v734
    %v736 = vtanh.pop %v729
    %v737 = vmul.f32 %v735, %v477
    %739 = vrot.lane.b32.xlu0 %v736, 64
    %v740 = vpop.permute.xlu0 %739
    %v742 = vmul.f32 %v735, %v740
    %744 = vrot.lane.b32.xlu0 %v742, 32
    %v745 = vpop.permute.xlu0 %744
    %v747 = vadd.f32 %v737, %v745
    %v748 = vtanh.pop %v747
    %750 = vrot.lane.b32.xlu0 %v748, 64
    %v751 = vpop.permute.xlu0 %750
    %v753 = vmul.f32 %v735, %v751
    %754 = vmatprep.subr.mxu0 0.0
    %755 = vmatpush1.msra.mxu0 0.0
    %756 = vmatprep.subr.mxu0 0.0
    %757 = vmatpush1.msra.mxu0 0.0
    %758 = vmatprep.subr.mxu0 0.0
    %759 = vmatpush1.msra.mxu0 0.0
    %760 = vmatprep.subr.mxu0 0.0
    %761 = vmatpush1.msra.mxu0 0.0
    %762 = vmatprep.subr.mxu0 0.0
    %763 = vmatpush1.msra.mxu0 0.0
    %764 = vmatprep.subr.mxu0 0.0
    %765 = vmatpush1.msra.mxu0 0.0
    %766 = vmatprep.subr.mxu0 0.0
    %767 = vmatpush1.msra.mxu0 0.0
    %768 = vmatprep.subr.mxu0 0.0
    %769 = vmatpush1.msra.mxu0 0.0
    %770 = vmatprep.subr.mxu0 0.0
    %771 = vmatpush1.msra.mxu0 0.0
    %772 = vmatprep.subr.mxu0 0.0
    %773 = vmatpush1.msra.mxu0 0.0
    %774 = vmatprep.subr.mxu0 0.0
    %775 = vmatpush1.msra.mxu0 0.0
    %776 = vmatprep.subr.mxu0 0.0
    %777 = vmatpush1.msra.mxu0 0.0
    %778 = vmatprep.subr.mxu0 0.0
    %779 = vmatpush1.msra.mxu0 %v200
    %780 = vmatprep.subr.mxu0 0.0
    %781 = vmatpush1.msra.mxu0 %v199
    %782 = vmatprep.subr.mxu0 0.0
    %783 = vmatpush1.msra.mxu0 %v198
    %784 = vmatprep.subr.mxu0 0.0
    %785 = vmatpush1.msra.mxu0 %v197
    %786 = vmatprep.subr.mxu0 0.0
    %787 = vmatpush2.msra.mxu0 0.0
    %788 = vmatprep.subr.mxu0 0.0
    %789 = vmatpush2.msra.mxu0 0.0
    %790 = vmatprep.subr.mxu0 0.0
    %791 = vmatpush2.msra.mxu0 0.0
    %792 = vmatprep.subr.mxu0 0.0
    %793 = vmatpush2.msra.mxu0 0.0
    %794 = vmatprep.subr.mxu0 0.0
    %795 = vmatpush2.msra.mxu0 0.0
    %796 = vmatprep.subr.mxu0 0.0
    %797 = vmatpush2.msra.mxu0 0.0
    %798 = vmatprep.subr.mxu0 0.0
    %799 = vmatpush2.msra.mxu0 0.0
    %800 = vmatprep.subr.mxu0 0.0
    %801 = vmatpush2.msra.mxu0 0.0
    %802 = vmatprep.subr.mxu0 0.0
    %803 = vmatpush2.msra.mxu0 0.0
    %804 = vmatprep.subr.mxu0 0.0
    %805 = vmatpush2.msra.mxu0 0.0
    %806 = vmatprep.subr.mxu0 0.0
    %807 = vmatpush2.msra.mxu0 0.0
    %808 = vmatprep.subr.mxu0 0.0
    %809 = vmatpush2.msra.mxu0 0.0
    %810 = vmatprep.subr.mxu0 0.0
    %811 = vmatpush2.msra.mxu0 0.0
    %812 = vmatprep.subr.mxu0 0.0
    %813 = vmatpush2.msra.mxu0 0.0
    %814 = vmatprep.subr.mxu0 0.0
    %815 = vmatpush2.msra.mxu0 0.0
    %816 = vmatprep.subr.mxu0 0.0
    %817 = vmatpush2.msra.mxu0 0.0
    %818 = vmatprep.mubr.f32.mxu0 0.0
    %819 = vmatmul.mubr.f32.gmra.mxu0 %v657
    %v820 = vpop.f32.mrf.mxu0
    %v821 = vadd.f32 0.0, %v820
    %v822 = vpop.f32.mrf.mxu0
    %823 = vdwg.mxu0
    %v824 = vadd.f32 %v169, %v821
    %v825 = vxor.u32 %v824, 2147483648
    %v826 = vmul.f32 %v825, 1.442695
    %v827 = vpow.pop %v826
    %v828 = vadd.f32 %v827, 1.0
    %v829 = vrcp.pop %v828
    %v830 = vmul.f32 1.0, %v829
    %v831 = vtanh.pop %v824
    %v832 = vmul.f32 %v830, %v572
    %834 = vrot.lane.b32.xlu0 %v831, 64
    %v835 = vpop.permute.xlu0 %834
    %v837 = vmul.f32 %v830, %v835
    %839 = vrot.lane.b32.xlu0 %v837, 32
    %v840 = vpop.permute.xlu0 %839
    %v842 = vadd.f32 %v832, %v840
    %v843 = vtanh.pop %v842
    %845 = vrot.lane.b32.xlu0 %v843, 64
    %v846 = vpop.permute.xlu0 %845
    %v848 = vmul.f32 %v830, %v846
    %850 = vrot.lane.b32.xlu0 %v753, 32
    %v851 = vpop.permute.xlu0 %850
    %v852 = vsel %vm67, %v851, 0
    %854 = vmatprep.subr.mxu0 0.0
    %855 = vmatpush1.msra.mxu0 0.0
    %856 = vmatprep.subr.mxu0 0.0
    %857 = vmatpush1.msra.mxu0 0.0
    %858 = vmatprep.subr.mxu0 0.0
    %859 = vmatpush1.msra.mxu0 0.0
    %860 = vmatprep.subr.mxu0 0.0
    %861 = vmatpush1.msra.mxu0 0.0
    %862 = vmatprep.subr.mxu0 0.0
    %863 = vmatpush1.msra.mxu0 0.0
    %864 = vmatprep.subr.mxu0 0.0
    %865 = vmatpush1.msra.mxu0 0.0
    %866 = vmatprep.subr.mxu0 0.0
    %867 = vmatpush1.msra.mxu0 0.0
    %868 = vmatprep.subr.mxu0 0.0
    %869 = vmatpush1.msra.mxu0 0.0
    %870 = vmatprep.subr.mxu0 0.0
    %871 = vmatpush1.msra.mxu0 0.0
    %872 = vmatprep.subr.mxu0 0.0
    %873 = vmatpush1.msra.mxu0 0.0
    %874 = vmatprep.subr.mxu0 0.0
    %875 = vmatpush1.msra.mxu0 0.0
    %876 = vmatprep.subr.mxu0 0.0
    %877 = vmatpush1.msra.mxu0 0.0
    %878 = vmatprep.subr.mxu0 0.0
    %879 = vmatpush1.msra.mxu0 %v208
    %880 = vmatprep.subr.mxu0 0.0
    %881 = vmatpush1.msra.mxu0 %v207
    %882 = vmatprep.subr.mxu0 0.0
    %883 = vmatpush1.msra.mxu0 %v206
    %884 = vmatprep.subr.mxu0 0.0
    %885 = vmatpush1.msra.mxu0 %v205
    %886 = vmatprep.subr.mxu0 0.0
    %887 = vmatpush2.msra.mxu0 0.0
    %888 = vmatprep.subr.mxu0 0.0
    %889 = vmatpush2.msra.mxu0 0.0
    %890 = vmatprep.subr.mxu0 0.0
    %891 = vmatpush2.msra.mxu0 0.0
    %892 = vmatprep.subr.mxu0 0.0
    %893 = vmatpush2.msra.mxu0 0.0
    %894 = vmatprep.subr.mxu0 0.0
    %895 = vmatpush2.msra.mxu0 0.0
    %896 = vmatprep.subr.mxu0 0.0
    %897 = vmatpush2.msra.mxu0 0.0
    %898 = vmatprep.subr.mxu0 0.0
    %899 = vmatpush2.msra.mxu0 0.0
    %900 = vmatprep.subr.mxu0 0.0
    %901 = vmatpush2.msra.mxu0 0.0
    %902 = vmatprep.subr.mxu0 0.0
    %903 = vmatpush2.msra.mxu0 0.0
    %904 = vmatprep.subr.mxu0 0.0
    %905 = vmatpush2.msra.mxu0 0.0
    %906 = vmatprep.subr.mxu0 0.0
    %907 = vmatpush2.msra.mxu0 0.0
    %908 = vmatprep.subr.mxu0 0.0
    %909 = vmatpush2.msra.mxu0 0.0
    %910 = vmatprep.subr.mxu0 0.0
    %911 = vmatpush2.msra.mxu0 0.0
    %912 = vmatprep.subr.mxu0 0.0
    %913 = vmatpush2.msra.mxu0 0.0
    %914 = vmatprep.subr.mxu0 0.0
    %915 = vmatpush2.msra.mxu0 0.0
    %916 = vmatprep.subr.mxu0 0.0
    %917 = vmatpush2.msra.mxu0 0.0
    %918 = vmatprep.mubr.f32.mxu0 0.0
    %919 = vmatmul.mubr.f32.gmra.mxu0 %v852
    %v920 = vpop.f32.mrf.mxu0
    %v921 = vadd.f32 0.0, %v920
    %v922 = vpop.f32.mrf.mxu0
    %923 = vdwg.mxu0
    %925 = vrot.lane.b32.xlu0 %v848, 32
    %v926 = vpop.permute.xlu0 %925
    %v927 = vsel %vm67, %v926, 0
    %929 = vmatprep.subr.mxu0 0.0
    %930 = vmatpush1.msra.mxu0 0.0
    %931 = vmatprep.subr.mxu0 0.0
    %932 = vmatpush1.msra.mxu0 0.0
    %933 = vmatprep.subr.mxu0 0.0
    %934 = vmatpush1.msra.mxu0 0.0
    %935 = vmatprep.subr.mxu0 0.0
    %936 = vmatpush1.msra.mxu0 0.0
    %937 = vmatprep.subr.mxu0 0.0
    %938 = vmatpush1.msra.mxu0 0.0
    %939 = vmatprep.subr.mxu0 0.0
    %940 = vmatpush1.msra.mxu0 0.0
    %941 = vmatprep.subr.mxu0 0.0
    %942 = vmatpush1.msra.mxu0 0.0
    %943 = vmatprep.subr.mxu0 0.0
    %944 = vmatpush1.msra.mxu0 0.0
    %945 = vmatprep.subr.mxu0 0.0
    %946 = vmatpush1.msra.mxu0 0.0
    %947 = vmatprep.subr.mxu0 0.0
    %948 = vmatpush1.msra.mxu0 0.0
    %949 = vmatprep.subr.mxu0 0.0
    %950 = vmatpush1.msra.mxu0 0.0
    %951 = vmatprep.subr.mxu0 0.0
    %952 = vmatpush1.msra.mxu0 0.0
    %953 = vmatprep.subr.mxu0 0.0
    %954 = vmatpush1.msra.mxu0 %v204
    %955 = vmatprep.subr.mxu0 0.0
    %956 = vmatpush1.msra.mxu0 %v203
    %957 = vmatprep.subr.mxu0 0.0
    %958 = vmatpush1.msra.mxu0 %v202
    %959 = vmatprep.subr.mxu0 0.0
    %960 = vmatpush1.msra.mxu0 %v201
    %961 = vmatprep.subr.mxu0 0.0
    %962 = vmatpush2.msra.mxu0 0.0
    %963 = vmatprep.subr.mxu0 0.0
    %964 = vmatpush2.msra.mxu0 0.0
    %965 = vmatprep.subr.mxu0 0.0
    %966 = vmatpush2.msra.mxu0 0.0
    %967 = vmatprep.subr.mxu0 0.0
    %968 = vmatpush2.msra.mxu0 0.0
    %969 = vmatprep.subr.mxu0 0.0
    %970 = vmatpush2.msra.mxu0 0.0
    %971 = vmatprep.subr.mxu0 0.0
    %972 = vmatpush2.msra.mxu0 0.0
    %973 = vmatprep.subr.mxu0 0.0
    %974 = vmatpush2.msra.mxu0 0.0
    %975 = vmatprep.subr.mxu0 0.0
    %976 = vmatpush2.msra.mxu0 0.0
    %977 = vmatprep.subr.mxu0 0.0
    %978 = vmatpush2.msra.mxu0 0.0
    %979 = vmatprep.subr.mxu0 0.0
    %980 = vmatpush2.msra.mxu0 0.0
    %981 = vmatprep.subr.mxu0 0.0
    %982 = vmatpush2.msra.mxu0 0.0
    %983 = vmatprep.subr.mxu0 0.0
    %984 = vmatpush2.msra.mxu0 0.0
    %985 = vmatprep.subr.mxu0 0.0
    %986 = vmatpush2.msra.mxu0 0.0
    %987 = vmatprep.subr.mxu0 0.0
    %988 = vmatpush2.msra.mxu0 0.0
    %989 = vmatprep.subr.mxu0 0.0
    %990 = vmatpush2.msra.mxu0 0.0
    %991 = vmatprep.subr.mxu0 0.0
    %992 = vmatpush2.msra.mxu0 0.0
    %993 = vmatprep.mubr.f32.mxu0 0.0
    %994 = vmatmul.mubr.f32.gmra.mxu0 %v927
    %v995 = vpop.f32.mrf.mxu0
    %v996 = vadd.f32 %v921, %v995
    %v997 = vpop.f32.mrf.mxu0
    %998 = vdwg.mxu0
    %v999 = vadd.f32 %v996, %v214
    %v1000 = vxor.u32 %v999, 2147483648
    %v1001 = vmul.f32 %v1000, 1.442695
    %v1002 = vpow.pop %v1001
    %v1003 = vadd.f32 %v1002, 1.0
    %v1004 = vrcp.pop %v1003
    %v1005 = vmul.f32 1.0, %v1004
    %v1006 = vtanh.pop %v999
    %v1007 = vmul.f32 %v1005, %v747
    %1009 = vrot.lane.b32.xlu0 %v1006, 64
    %v1010 = vpop.permute.xlu0 %1009
    %v1012 = vmul.f32 %v1005, %v1010
    %1014 = vrot.lane.b32.xlu0 %v1012, 32
    %v1015 = vpop.permute.xlu0 %1014
    %v1017 = vadd.f32 %v1007, %v1015
    %v1018 = vtanh.pop %v1017
    %1020 = vrot.lane.b32.xlu0 %v1018, 64
    %v1021 = vpop.permute.xlu0 %1020
    %v1023 = vmul.f32 %v1005, %v1021
    %1024 = vmatprep.subr.mxu0 0.0
    %1025 = vmatpush1.msra.mxu0 0.0
    %1026 = vmatprep.subr.mxu0 0.0
    %1027 = vmatpush1.msra.mxu0 0.0
    %1028 = vmatprep.subr.mxu0 0.0
    %1029 = vmatpush1.msra.mxu0 0.0
    %1030 = vmatprep.subr.mxu0 0.0
    %1031 = vmatpush1.msra.mxu0 0.0
    %1032 = vmatprep.subr.mxu0 0.0
    %1033 = vmatpush1.msra.mxu0 0.0
    %1034 = vmatprep.subr.mxu0 0.0
    %1035 = vmatpush1.msra.mxu0 0.0
    %1036 = vmatprep.subr.mxu0 0.0
    %1037 = vmatpush1.msra.mxu0 0.0
    %1038 = vmatprep.subr.mxu0 0.0
    %1039 = vmatpush1.msra.mxu0 0.0
    %1040 = vmatprep.subr.mxu0 0.0
    %1041 = vmatpush1.msra.mxu0 0.0
    %1042 = vmatprep.subr.mxu0 0.0
    %1043 = vmatpush1.msra.mxu0 0.0
    %1044 = vmatprep.subr.mxu0 0.0
    %1045 = vmatpush1.msra.mxu0 0.0
    %1046 = vmatprep.subr.mxu0 0.0
    %1047 = vmatpush1.msra.mxu0 0.0
    %1048 = vmatprep.subr.mxu0 0.0
    %1049 = vmatpush1.msra.mxu0 %v200
    %1050 = vmatprep.subr.mxu0 0.0
    %1051 = vmatpush1.msra.mxu0 %v199
    %1052 = vmatprep.subr.mxu0 0.0
    %1053 = vmatpush1.msra.mxu0 %v198
    %1054 = vmatprep.subr.mxu0 0.0
    %1055 = vmatpush1.msra.mxu0 %v197
    %1056 = vmatprep.subr.mxu0 0.0
    %1057 = vmatpush2.msra.mxu0 0.0
    %1058 = vmatprep.subr.mxu0 0.0
    %1059 = vmatpush2.msra.mxu0 0.0
    %1060 = vmatprep.subr.mxu0 0.0
    %1061 = vmatpush2.msra.mxu0 0.0
    %1062 = vmatprep.subr.mxu0 0.0
    %1063 = vmatpush2.msra.mxu0 0.0
    %1064 = vmatprep.subr.mxu0 0.0
    %1065 = vmatpush2.msra.mxu0 0.0
    %1066 = vmatprep.subr.mxu0 0.0
    %1067 = vmatpush2.msra.mxu0 0.0
    %1068 = vmatprep.subr.mxu0 0.0
    %1069 = vmatpush2.msra.mxu0 0.0
    %1070 = vmatprep.subr.mxu0 0.0
    %1071 = vmatpush2.msra.mxu0 0.0
    %1072 = vmatprep.subr.mxu0 0.0
    %1073 = vmatpush2.msra.mxu0 0.0
    %1074 = vmatprep.subr.mxu0 0.0
    %1075 = vmatpush2.msra.mxu0 0.0
    %1076 = vmatprep.subr.mxu0 0.0
    %1077 = vmatpush2.msra.mxu0 0.0
    %1078 = vmatprep.subr.mxu0 0.0
    %1079 = vmatpush2.msra.mxu0 0.0
    %1080 = vmatprep.subr.mxu0 0.0
    %1081 = vmatpush2.msra.mxu0 0.0
    %1082 = vmatprep.subr.mxu0 0.0
    %1083 = vmatpush2.msra.mxu0 0.0
    %1084 = vmatprep.subr.mxu0 0.0
    %1085 = vmatpush2.msra.mxu0 0.0
    %1086 = vmatprep.subr.mxu0 0.0
    %1087 = vmatpush2.msra.mxu0 0.0
    %1088 = vmatprep.mubr.f32.mxu0 0.0
    %1089 = vmatmul.mubr.f32.gmra.mxu0 %v927
    %v1090 = vpop.f32.mrf.mxu0
    %v1091 = vadd.f32 0.0, %v1090
    %v1092 = vpop.f32.mrf.mxu0
    %1093 = vdwg.mxu0
    %v1094 = vadd.f32 %v174, %v1091
    %v1095 = vxor.u32 %v1094, 2147483648
    %v1096 = vmul.f32 %v1095, 1.442695
    %v1097 = vpow.pop %v1096
    %v1098 = vadd.f32 %v1097, 1.0
    %v1099 = vrcp.pop %v1098
    %v1100 = vmul.f32 1.0, %v1099
    %v1101 = vtanh.pop %v1094
    %v1102 = vmul.f32 %v1100, %v842
    %1104 = vrot.lane.b32.xlu0 %v1101, 64
    %v1105 = vpop.permute.xlu0 %1104
    %v1107 = vmul.f32 %v1100, %v1105
    %1109 = vrot.lane.b32.xlu0 %v1107, 32
    %v1110 = vpop.permute.xlu0 %1109
    %v1112 = vadd.f32 %v1102, %v1110
    %v1113 = vtanh.pop %v1112
    %1115 = vrot.lane.b32.xlu0 %v1113, 64
    %v1116 = vpop.permute.xlu0 %1115
    %v1118 = vmul.f32 %v1100, %v1116
    %1120 = vrot.lane.b32.xlu0 %v1023, 32
    %v1121 = vpop.permute.xlu0 %1120
    %v1122 = vsel %vm67, %v1121, 0
    %1124 = vmatprep.subr.mxu0 0.0
    %1125 = vmatpush1.msra.mxu0 0.0
    %1126 = vmatprep.subr.mxu0 0.0
    %1127 = vmatpush1.msra.mxu0 0.0
    %1128 = vmatprep.subr.mxu0 0.0
    %1129 = vmatpush1.msra.mxu0 0.0
    %1130 = vmatprep.subr.mxu0 0.0
    %1131 = vmatpush1.msra.mxu0 0.0
    %1132 = vmatprep.subr.mxu0 0.0
    %1133 = vmatpush1.msra.mxu0 0.0
    %1134 = vmatprep.subr.mxu0 0.0
    %1135 = vmatpush1.msra.mxu0 0.0
    %1136 = vmatprep.subr.mxu0 0.0
    %1137 = vmatpush1.msra.mxu0 0.0
    %1138 = vmatprep.subr.mxu0 0.0
    %1139 = vmatpush1.msra.mxu0 0.0
    %1140 = vmatprep.subr.mxu0 0.0
    %1141 = vmatpush1.msra.mxu0 0.0
    %1142 = vmatprep.subr.mxu0 0.0
    %1143 = vmatpush1.msra.mxu0 0.0
    %1144 = vmatprep.subr.mxu0 0.0
    %1145 = vmatpush1.msra.mxu0 0.0
    %1146 = vmatprep.subr.mxu0 0.0
    %1147 = vmatpush1.msra.mxu0 0.0
    %1148 = vmatprep.subr.mxu0 0.0
    %1149 = vmatpush1.msra.mxu0 %v208
    %1150 = vmatprep.subr.mxu0 0.0
    %1151 = vmatpush1.msra.mxu0 %v207
    %1152 = vmatprep.subr.mxu0 0.0
    %1153 = vmatpush1.msra.mxu0 %v206
    %1154 = vmatprep.subr.mxu0 0.0
    %1155 = vmatpush1.msra.mxu0 %v205
    %1156 = vmatprep.subr.mxu0 0.0
    %1157 = vmatpush2.msra.mxu0 0.0
    %1158 = vmatprep.subr.mxu0 0.0
    %1159 = vmatpush2.msra.mxu0 0.0
    %1160 = vmatprep.subr.mxu0 0.0
    %1161 = vmatpush2.msra.mxu0 0.0
    %1162 = vmatprep.subr.mxu0 0.0
    %1163 = vmatpush2.msra.mxu0 0.0
    %1164 = vmatprep.subr.mxu0 0.0
    %1165 = vmatpush2.msra.mxu0 0.0
    %1166 = vmatprep.subr.mxu0 0.0
    %1167 = vmatpush2.msra.mxu0 0.0
    %1168 = vmatprep.subr.mxu0 0.0
    %1169 = vmatpush2.msra.mxu0 0.0
    %1170 = vmatprep.subr.mxu0 0.0
    %1171 = vmatpush2.msra.mxu0 0.0
    %1172 = vmatprep.subr.mxu0 0.0
    %1173 = vmatpush2.msra.mxu0 0.0
    %1174 = vmatprep.subr.mxu0 0.0
    %1175 = vmatpush2.msra.mxu0 0.0
    %1176 = vmatprep.subr.mxu0 0.0
    %1177 = vmatpush2.msra.mxu0 0.0
    %1178 = vmatprep.subr.mxu0 0.0
    %1179 = vmatpush2.msra.mxu0 0.0
    %1180 = vmatprep.subr.mxu0 0.0
    %1181 = vmatpush2.msra.mxu0 0.0
    %1182 = vmatprep.subr.mxu0 0.0
    %1183 = vmatpush2.msra.mxu0 0.0
    %1184 = vmatprep.subr.mxu0 0.0
    %1185 = vmatpush2.msra.mxu0 0.0
    %1186 = vmatprep.subr.mxu0 0.0
    %1187 = vmatpush2.msra.mxu0 0.0
    %1188 = vmatprep.mubr.f32.mxu0 0.0
    %1189 = vmatmul.mubr.f32.gmra.mxu0 %v1122
    %v1190 = vpop.f32.mrf.mxu0
    %v1191 = vadd.f32 0.0, %v1190
    %v1192 = vpop.f32.mrf.mxu0
    %1193 = vdwg.mxu0
    %1195 = vrot.lane.b32.xlu0 %v1118, 32
    %v1196 = vpop.permute.xlu0 %1195
    %v1197 = vsel %vm67, %v1196, 0
    %1199 = vmatprep.subr.mxu0 0.0
    %1200 = vmatpush1.msra.mxu0 0.0
    %1201 = vmatprep.subr.mxu0 0.0
    %1202 = vmatpush1.msra.mxu0 0.0
    %1203 = vmatprep.subr.mxu0 0.0
    %1204 = vmatpush1.msra.mxu0 0.0
    %1205 = vmatprep.subr.mxu0 0.0
    %1206 = vmatpush1.msra.mxu0 0.0
    %1207 = vmatprep.subr.mxu0 0.0
    %1208 = vmatpush1.msra.mxu0 0.0
    %1209 = vmatprep.subr.mxu0 0.0
    %1210 = vmatpush1.msra.mxu0 0.0
    %1211 = vmatprep.subr.mxu0 0.0
    %1212 = vmatpush1.msra.mxu0 0.0
    %1213 = vmatprep.subr.mxu0 0.0
    %1214 = vmatpush1.msra.mxu0 0.0
    %1215 = vmatprep.subr.mxu0 0.0
    %1216 = vmatpush1.msra.mxu0 0.0
    %1217 = vmatprep.subr.mxu0 0.0
    %1218 = vmatpush1.msra.mxu0 0.0
    %1219 = vmatprep.subr.mxu0 0.0
    %1220 = vmatpush1.msra.mxu0 0.0
    %1221 = vmatprep.subr.mxu0 0.0
    %1222 = vmatpush1.msra.mxu0 0.0
    %1223 = vmatprep.subr.mxu0 0.0
    %1224 = vmatpush1.msra.mxu0 %v204
    %1225 = vmatprep.subr.mxu0 0.0
    %1226 = vmatpush1.msra.mxu0 %v203
    %1227 = vmatprep.subr.mxu0 0.0
    %1228 = vmatpush1.msra.mxu0 %v202
    %1229 = vmatprep.subr.mxu0 0.0
    %1230 = vmatpush1.msra.mxu0 %v201
    %1231 = vmatprep.subr.mxu0 0.0
    %1232 = vmatpush2.msra.mxu0 0.0
    %1233 = vmatprep.subr.mxu0 0.0
    %1234 = vmatpush2.msra.mxu0 0.0
    %1235 = vmatprep.subr.mxu0 0.0
    %1236 = vmatpush2.msra.mxu0 0.0
    %1237 = vmatprep.subr.mxu0 0.0
    %1238 = vmatpush2.msra.mxu0 0.0
    %1239 = vmatprep.subr.mxu0 0.0
    %1240 = vmatpush2.msra.mxu0 0.0
    %1241 = vmatprep.subr.mxu0 0.0
    %1242 = vmatpush2.msra.mxu0 0.0
    %1243 = vmatprep.subr.mxu0 0.0
    %1244 = vmatpush2.msra.mxu0 0.0
    %1245 = vmatprep.subr.mxu0 0.0
    %1246 = vmatpush2.msra.mxu0 0.0
    %1247 = vmatprep.subr.mxu0 0.0
    %1248 = vmatpush2.msra.mxu0 0.0
    %1249 = vmatprep.subr.mxu0 0.0
    %1250 = vmatpush2.msra.mxu0 0.0
    %1251 = vmatprep.subr.mxu0 0.0
    %1252 = vmatpush2.msra.mxu0 0.0
    %1253 = vmatprep.subr.mxu0 0.0
    %1254 = vmatpush2.msra.mxu0 0.0
    %1255 = vmatprep.subr.mxu0 0.0
    %1256 = vmatpush2.msra.mxu0 0.0
    %1257 = vmatprep.subr.mxu0 0.0
    %1258 = vmatpush2.msra.mxu0 0.0
    %1259 = vmatprep.subr.mxu0 0.0
    %1260 = vmatpush2.msra.mxu0 0.0
    %1261 = vmatprep.subr.mxu0 0.0
    %1262 = vmatpush2.msra.mxu0 0.0
    %1263 = vmatprep.mubr.f32.mxu0 0.0
    %1264 = vmatmul.mubr.f32.gmra.mxu0 %v1197
    %v1265 = vpop.f32.mrf.mxu0
    %v1266 = vadd.f32 %v1191, %v1265
    %v1267 = vpop.f32.mrf.mxu0
    %1268 = vdwg.mxu0
    %v1269 = vadd.f32 %v1266, %v214
    %v1270 = vxor.u32 %v1269, 2147483648
    %v1271 = vmul.f32 %v1270, 1.442695
    %v1272 = vpow.pop %v1271
    %v1273 = vadd.f32 %v1272, 1.0
    %v1274 = vrcp.pop %v1273
    %v1275 = vmul.f32 1.0, %v1274
    %v1276 = vtanh.pop %v1269
    %v1277 = vmul.f32 %v1275, %v1017
    %1279 = vrot.lane.b32.xlu0 %v1276, 64
    %v1280 = vpop.permute.xlu0 %1279
    %v1282 = vmul.f32 %v1275, %v1280
    %1284 = vrot.lane.b32.xlu0 %v1282, 32
    %v1285 = vpop.permute.xlu0 %1284
    %v1287 = vadd.f32 %v1277, %v1285
    %v1288 = vtanh.pop %v1287
    %1290 = vrot.lane.b32.xlu0 %v1288, 64
    %v1291 = vpop.permute.xlu0 %1290
    %v1293 = vmul.f32 %v1275, %v1291
    %1294 = vmatprep.subr.mxu0 0.0
    %1295 = vmatpush1.msra.mxu0 0.0
    %1296 = vmatprep.subr.mxu0 0.0
    %1297 = vmatpush1.msra.mxu0 0.0
    %1298 = vmatprep.subr.mxu0 0.0
    %1299 = vmatpush1.msra.mxu0 0.0
    %1300 = vmatprep.subr.mxu0 0.0
    %1301 = vmatpush1.msra.mxu0 0.0
    %1302 = vmatprep.subr.mxu0 0.0
    %1303 = vmatpush1.msra.mxu0 0.0
    %1304 = vmatprep.subr.mxu0 0.0
    %1305 = vmatpush1.msra.mxu0 0.0
    %1306 = vmatprep.subr.mxu0 0.0
    %1307 = vmatpush1.msra.mxu0 0.0
    %1308 = vmatprep.subr.mxu0 0.0
    %1309 = vmatpush1.msra.mxu0 0.0
    %1310 = vmatprep.subr.mxu0 0.0
    %1311 = vmatpush1.msra.mxu0 0.0
    %1312 = vmatprep.subr.mxu0 0.0
    %1313 = vmatpush1.msra.mxu0 0.0
    %1314 = vmatprep.subr.mxu0 0.0
    %1315 = vmatpush1.msra.mxu0 0.0
    %1316 = vmatprep.subr.mxu0 0.0
    %1317 = vmatpush1.msra.mxu0 0.0
    %1318 = vmatprep.subr.mxu0 0.0
    %1319 = vmatpush1.msra.mxu0 %v200
    %1320 = vmatprep.subr.mxu0 0.0
    %1321 = vmatpush1.msra.mxu0 %v199
    %1322 = vmatprep.subr.mxu0 0.0
    %1323 = vmatpush1.msra.mxu0 %v198
    %1324 = vmatprep.subr.mxu0 0.0
    %1325 = vmatpush1.msra.mxu0 %v197
    %1326 = vmatprep.subr.mxu0 0.0
    %1327 = vmatpush2.msra.mxu0 0.0
    %1328 = vmatprep.subr.mxu0 0.0
    %1329 = vmatpush2.msra.mxu0 0.0
    %1330 = vmatprep.subr.mxu0 0.0
    %1331 = vmatpush2.msra.mxu0 0.0
    %1332 = vmatprep.subr.mxu0 0.0
    %1333 = vmatpush2.msra.mxu0 0.0
    %1334 = vmatprep.subr.mxu0 0.0
    %1335 = vmatpush2.msra.mxu0 0.0
    %1336 = vmatprep.subr.mxu0 0.0
    %1337 = vmatpush2.msra.mxu0 0.0
    %1338 = vmatprep.subr.mxu0 0.0
    %1339 = vmatpush2.msra.mxu0 0.0
    %1340 = vmatprep.subr.mxu0 0.0
    %1341 = vmatpush2.msra.mxu0 0.0
    %1342 = vmatprep.subr.mxu0 0.0
    %1343 = vmatpush2.msra.mxu0 0.0
    %1344 = vmatprep.subr.mxu0 0.0
    %1345 = vmatpush2.msra.mxu0 0.0
    %1346 = vmatprep.subr.mxu0 0.0
    %1347 = vmatpush2.msra.mxu0 0.0
    %1348 = vmatprep.subr.mxu0 0.0
    %1349 = vmatpush2.msra.mxu0 0.0
    %1350 = vmatprep.subr.mxu0 0.0
    %1351 = vmatpush2.msra.mxu0 0.0
    %1352 = vmatprep.subr.mxu0 0.0
    %1353 = vmatpush2.msra.mxu0 0.0
    %1354 = vmatprep.subr.mxu0 0.0
    %1355 = vmatpush2.msra.mxu0 0.0
    %1356 = vmatprep.subr.mxu0 0.0
    %1357 = vmatpush2.msra.mxu0 0.0
    %1358 = vmatprep.mubr.f32.mxu0 0.0
    %1359 = vmatmul.mubr.f32.gmra.mxu0 %v1197
    %v1360 = vpop.f32.mrf.mxu0
    %v1361 = vadd.f32 0.0, %v1360
    %v1362 = vpop.f32.mrf.mxu0
    %1363 = vdwg.mxu0
    %v1364 = vadd.f32 %v179, %v1361
    %v1365 = vxor.u32 %v1364, 2147483648
    %v1366 = vmul.f32 %v1365, 1.442695
    %v1367 = vpow.pop %v1366
    %v1368 = vadd.f32 %v1367, 1.0
    %v1369 = vrcp.pop %v1368
    %v1370 = vmul.f32 1.0, %v1369
    %v1371 = vtanh.pop %v1364
    %v1372 = vmul.f32 %v1370, %v1112
    %1374 = vrot.lane.b32.xlu0 %v1371, 64
    %v1375 = vpop.permute.xlu0 %1374
    %v1377 = vmul.f32 %v1370, %v1375
    %1379 = vrot.lane.b32.xlu0 %v1377, 32
    %v1380 = vpop.permute.xlu0 %1379
    %v1382 = vadd.f32 %v1372, %v1380
    %v1383 = vtanh.pop %v1382
    %1385 = vrot.lane.b32.xlu0 %v1383, 64
    %v1386 = vpop.permute.xlu0 %1385
    %v1388 = vmul.f32 %v1370, %v1386
    %1390 = vrot.lane.b32.xlu0 %v1293, 32
    %v1391 = vpop.permute.xlu0 %1390
    %v1392 = vsel %vm67, %v1391, 0
    %1394 = vmatprep.subr.mxu0 0.0
    %1395 = vmatpush1.msra.mxu0 0.0
    %1396 = vmatprep.subr.mxu0 0.0
    %1397 = vmatpush1.msra.mxu0 0.0
    %1398 = vmatprep.subr.mxu0 0.0
    %1399 = vmatpush1.msra.mxu0 0.0
    %1400 = vmatprep.subr.mxu0 0.0
    %1401 = vmatpush1.msra.mxu0 0.0
    %1402 = vmatprep.subr.mxu0 0.0
    %1403 = vmatpush1.msra.mxu0 0.0
    %1404 = vmatprep.subr.mxu0 0.0
    %1405 = vmatpush1.msra.mxu0 0.0
    %1406 = vmatprep.subr.mxu0 0.0
    %1407 = vmatpush1.msra.mxu0 0.0
    %1408 = vmatprep.subr.mxu0 0.0
    %1409 = vmatpush1.msra.mxu0 0.0
    %1410 = vmatprep.subr.mxu0 0.0
    %1411 = vmatpush1.msra.mxu0 0.0
    %1412 = vmatprep.subr.mxu0 0.0
    %1413 = vmatpush1.msra.mxu0 0.0
    %1414 = vmatprep.subr.mxu0 0.0
    %1415 = vmatpush1.msra.mxu0 0.0
    %1416 = vmatprep.subr.mxu0 0.0
    %1417 = vmatpush1.msra.mxu0 0.0
    %1418 = vmatprep.subr.mxu0 0.0
    %1419 = vmatpush1.msra.mxu0 %v208
    %1420 = vmatprep.subr.mxu0 0.0
    %1421 = vmatpush1.msra.mxu0 %v207
    %1422 = vmatprep.subr.mxu0 0.0
    %1423 = vmatpush1.msra.mxu0 %v206
    %1424 = vmatprep.subr.mxu0 0.0
    %1425 = vmatpush1.msra.mxu0 %v205
    %1426 = vmatprep.subr.mxu0 0.0
    %1427 = vmatpush2.msra.mxu0 0.0
    %1428 = vmatprep.subr.mxu0 0.0
    %1429 = vmatpush2.msra.mxu0 0.0
    %1430 = vmatprep.subr.mxu0 0.0
    %1431 = vmatpush2.msra.mxu0 0.0
    %1432 = vmatprep.subr.mxu0 0.0
    %1433 = vmatpush2.msra.mxu0 0.0
    %1434 = vmatprep.subr.mxu0 0.0
    %1435 = vmatpush2.msra.mxu0 0.0
    %1436 = vmatprep.subr.mxu0 0.0
    %1437 = vmatpush2.msra.mxu0 0.0
    %1438 = vmatprep.subr.mxu0 0.0
    %1439 = vmatpush2.msra.mxu0 0.0
    %1440 = vmatprep.subr.mxu0 0.0
    %1441 = vmatpush2.msra.mxu0 0.0
    %1442 = vmatprep.subr.mxu0 0.0
    %1443 = vmatpush2.msra.mxu0 0.0
    %1444 = vmatprep.subr.mxu0 0.0
    %1445 = vmatpush2.msra.mxu0 0.0
    %1446 = vmatprep.subr.mxu0 0.0
    %1447 = vmatpush2.msra.mxu0 0.0
    %1448 = vmatprep.subr.mxu0 0.0
    %1449 = vmatpush2.msra.mxu0 0.0
    %1450 = vmatprep.subr.mxu0 0.0
    %1451 = vmatpush2.msra.mxu0 0.0
    %1452 = vmatprep.subr.mxu0 0.0
    %1453 = vmatpush2.msra.mxu0 0.0
    %1454 = vmatprep.subr.mxu0 0.0
    %1455 = vmatpush2.msra.mxu0 0.0
    %1456 = vmatprep.subr.mxu0 0.0
    %1457 = vmatpush2.msra.mxu0 0.0
    %1458 = vmatprep.mubr.f32.mxu0 0.0
    %1459 = vmatmul.mubr.f32.gmra.mxu0 %v1392
    %v1460 = vpop.f32.mrf.mxu0
    %v1461 = vadd.f32 0.0, %v1460
    %v1462 = vpop.f32.mrf.mxu0
    %1463 = vdwg.mxu0
    %1465 = vrot.lane.b32.xlu0 %v1388, 32
    %v1466 = vpop.permute.xlu0 %1465
    %v1467 = vsel %vm67, %v1466, 0
    %1469 = vmatprep.subr.mxu0 0.0
    %1470 = vmatpush1.msra.mxu0 0.0
    %1471 = vmatprep.subr.mxu0 0.0
    %1472 = vmatpush1.msra.mxu0 0.0
    %1473 = vmatprep.subr.mxu0 0.0
    %1474 = vmatpush1.msra.mxu0 0.0
    %1475 = vmatprep.subr.mxu0 0.0
    %1476 = vmatpush1.msra.mxu0 0.0
    %1477 = vmatprep.subr.mxu0 0.0
    %1478 = vmatpush1.msra.mxu0 0.0
    %1479 = vmatprep.subr.mxu0 0.0
    %1480 = vmatpush1.msra.mxu0 0.0
    %1481 = vmatprep.subr.mxu0 0.0
    %1482 = vmatpush1.msra.mxu0 0.0
    %1483 = vmatprep.subr.mxu0 0.0
    %1484 = vmatpush1.msra.mxu0 0.0
    %1485 = vmatprep.subr.mxu0 0.0
    %1486 = vmatpush1.msra.mxu0 0.0
    %1487 = vmatprep.subr.mxu0 0.0
    %1488 = vmatpush1.msra.mxu0 0.0
    %1489 = vmatprep.subr.mxu0 0.0
    %1490 = vmatpush1.msra.mxu0 0.0
    %1491 = vmatprep.subr.mxu0 0.0
    %1492 = vmatpush1.msra.mxu0 0.0
    %1493 = vmatprep.subr.mxu0 0.0
    %1494 = vmatpush1.msra.mxu0 %v204
    %1495 = vmatprep.subr.mxu0 0.0
    %1496 = vmatpush1.msra.mxu0 %v203
    %1497 = vmatprep.subr.mxu0 0.0
    %1498 = vmatpush1.msra.mxu0 %v202
    %1499 = vmatprep.subr.mxu0 0.0
    %1500 = vmatpush1.msra.mxu0 %v201
    %1501 = vmatprep.subr.mxu0 0.0
    %1502 = vmatpush2.msra.mxu0 0.0
    %1503 = vmatprep.subr.mxu0 0.0
    %1504 = vmatpush2.msra.mxu0 0.0
    %1505 = vmatprep.subr.mxu0 0.0
    %1506 = vmatpush2.msra.mxu0 0.0
    %1507 = vmatprep.subr.mxu0 0.0
    %1508 = vmatpush2.msra.mxu0 0.0
    %1509 = vmatprep.subr.mxu0 0.0
    %1510 = vmatpush2.msra.mxu0 0.0
    %1511 = vmatprep.subr.mxu0 0.0
    %1512 = vmatpush2.msra.mxu0 0.0
    %1513 = vmatprep.subr.mxu0 0.0
    %1514 = vmatpush2.msra.mxu0 0.0
    %1515 = vmatprep.subr.mxu0 0.0
    %1516 = vmatpush2.msra.mxu0 0.0
    %1517 = vmatprep.subr.mxu0 0.0
    %1518 = vmatpush2.msra.mxu0 0.0
    %1519 = vmatprep.subr.mxu0 0.0
    %1520 = vmatpush2.msra.mxu0 0.0
    %1521 = vmatprep.subr.mxu0 0.0
    %1522 = vmatpush2.msra.mxu0 0.0
    %1523 = vmatprep.subr.mxu0 0.0
    %1524 = vmatpush2.msra.mxu0 0.0
    %1525 = vmatprep.subr.mxu0 0.0
    %1526 = vmatpush2.msra.mxu0 0.0
    %1527 = vmatprep.subr.mxu0 0.0
    %1528 = vmatpush2.msra.mxu0 0.0
    %1529 = vmatprep.subr.mxu0 0.0
    %1530 = vmatpush2.msra.mxu0 0.0
    %1531 = vmatprep.subr.mxu0 0.0
    %1532 = vmatpush2.msra.mxu0 0.0
    %1533 = vmatprep.mubr.f32.mxu0 0.0
    %1534 = vmatmul.mubr.f32.gmra.mxu0 %v1467
    %v1535 = vpop.f32.mrf.mxu0
    %v1536 = vadd.f32 %v1461, %v1535
    %v1537 = vpop.f32.mrf.mxu0
    %1538 = vdwg.mxu0
    %v1539 = vadd.f32 %v1536, %v214
    %v1540 = vxor.u32 %v1539, 2147483648
    %v1541 = vmul.f32 %v1540, 1.442695
    %v1542 = vpow.pop %v1541
    %v1543 = vadd.f32 %v1542, 1.0
    %v1544 = vrcp.pop %v1543
    %v1545 = vmul.f32 1.0, %v1544
    %v1546 = vtanh.pop %v1539
    %v1547 = vmul.f32 %v1545, %v1287
    %1549 = vrot.lane.b32.xlu0 %v1546, 64
    %v1550 = vpop.permute.xlu0 %1549
    %v1552 = vmul.f32 %v1545, %v1550
    %1554 = vrot.lane.b32.xlu0 %v1552, 32
    %v1555 = vpop.permute.xlu0 %1554
    %v1557 = vadd.f32 %v1547, %v1555
    %v1558 = vtanh.pop %v1557
    %1560 = vrot.lane.b32.xlu0 %v1558, 64
    %v1561 = vpop.permute.xlu0 %1560
    %v1563 = vmul.f32 %v1545, %v1561
    %1564 = vmatprep.subr.mxu0 0.0
    %1565 = vmatpush1.msra.mxu0 0.0
    %1566 = vmatprep.subr.mxu0 0.0
    %1567 = vmatpush1.msra.mxu0 0.0
    %1568 = vmatprep.subr.mxu0 0.0
    %1569 = vmatpush1.msra.mxu0 0.0
    %1570 = vmatprep.subr.mxu0 0.0
    %1571 = vmatpush1.msra.mxu0 0.0
    %1572 = vmatprep.subr.mxu0 0.0
    %1573 = vmatpush1.msra.mxu0 0.0
    %1574 = vmatprep.subr.mxu0 0.0
    %1575 = vmatpush1.msra.mxu0 0.0
    %1576 = vmatprep.subr.mxu0 0.0
    %1577 = vmatpush1.msra.mxu0 0.0
    %1578 = vmatprep.subr.mxu0 0.0
    %1579 = vmatpush1.msra.mxu0 0.0
    %1580 = vmatprep.subr.mxu0 0.0
    %1581 = vmatpush1.msra.mxu0 0.0
    %1582 = vmatprep.subr.mxu0 0.0
    %1583 = vmatpush1.msra.mxu0 0.0
    %1584 = vmatprep.subr.mxu0 0.0
    %1585 = vmatpush1.msra.mxu0 0.0
    %1586 = vmatprep.subr.mxu0 0.0
    %1587 = vmatpush1.msra.mxu0 0.0
    %1588 = vmatprep.subr.mxu0 0.0
    %1589 = vmatpush1.msra.mxu0 %v200
    %1590 = vmatprep.subr.mxu0 0.0
    %1591 = vmatpush1.msra.mxu0 %v199
    %1592 = vmatprep.subr.mxu0 0.0
    %1593 = vmatpush1.msra.mxu0 %v198
    %1594 = vmatprep.subr.mxu0 0.0
    %1595 = vmatpush1.msra.mxu0 %v197
    %1596 = vmatprep.subr.mxu0 0.0
    %1597 = vmatpush2.msra.mxu0 0.0
    %1598 = vmatprep.subr.mxu0 0.0
    %1599 = vmatpush2.msra.mxu0 0.0
    %1600 = vmatprep.subr.mxu0 0.0
    %1601 = vmatpush2.msra.mxu0 0.0
    %1602 = vmatprep.subr.mxu0 0.0
    %1603 = vmatpush2.msra.mxu0 0.0
    %1604 = vmatprep.subr.mxu0 0.0
    %1605 = vmatpush2.msra.mxu0 0.0
    %1606 = vmatprep.subr.mxu0 0.0
    %1607 = vmatpush2.msra.mxu0 0.0
    %1608 = vmatprep.subr.mxu0 0.0
    %1609 = vmatpush2.msra.mxu0 0.0
    %1610 = vmatprep.subr.mxu0 0.0
    %1611 = vmatpush2.msra.mxu0 0.0
    %1612 = vmatprep.subr.mxu0 0.0
    %1613 = vmatpush2.msra.mxu0 0.0
    %1614 = vmatprep.subr.mxu0 0.0
    %1615 = vmatpush2.msra.mxu0 0.0
    %1616 = vmatprep.subr.mxu0 0.0
    %1617 = vmatpush2.msra.mxu0 0.0
    %1618 = vmatprep.subr.mxu0 0.0
    %1619 = vmatpush2.msra.mxu0 0.0
    %1620 = vmatprep.subr.mxu0 0.0
    %1621 = vmatpush2.msra.mxu0 0.0
    %1622 = vmatprep.subr.mxu0 0.0
    %1623 = vmatpush2.msra.mxu0 0.0
    %1624 = vmatprep.subr.mxu0 0.0
    %1625 = vmatpush2.msra.mxu0 0.0
    %1626 = vmatprep.subr.mxu0 0.0
    %1627 = vmatpush2.msra.mxu0 0.0
    %1628 = vmatprep.mubr.f32.mxu0 0.0
    %1629 = vmatmul.mubr.f32.gmra.mxu0 %v1467
    %v1630 = vpop.f32.mrf.mxu0
    %v1631 = vadd.f32 0.0, %v1630
    %v1632 = vpop.f32.mrf.mxu0
    %1633 = vdwg.mxu0
    %v1634 = vadd.f32 %v184, %v1631
    %v1635 = vxor.u32 %v1634, 2147483648
    %v1636 = vmul.f32 %v1635, 1.442695
    %v1637 = vpow.pop %v1636
    %v1638 = vadd.f32 %v1637, 1.0
    %v1639 = vrcp.pop %v1638
    %v1640 = vmul.f32 1.0, %v1639
    %v1641 = vtanh.pop %v1634
    %v1642 = vmul.f32 %v1640, %v1382
    %1644 = vrot.lane.b32.xlu0 %v1641, 64
    %v1645 = vpop.permute.xlu0 %1644
    %v1647 = vmul.f32 %v1640, %v1645
    %1649 = vrot.lane.b32.xlu0 %v1647, 32
    %v1650 = vpop.permute.xlu0 %1649
    %v1652 = vadd.f32 %v1642, %v1650
    %v1653 = vtanh.pop %v1652
    %1655 = vrot.lane.b32.xlu0 %v1653, 64
    %v1656 = vpop.permute.xlu0 %1655
    %v1658 = vmul.f32 %v1640, %v1656
    %1660 = vrot.lane.b32.xlu0 %v1563, 32
    %v1661 = vpop.permute.xlu0 %1660
    %v1662 = vsel %vm67, %v1661, 0
    %1664 = vmatprep.subr.mxu0 0.0
    %1665 = vmatpush1.msra.mxu0 0.0
    %1666 = vmatprep.subr.mxu0 0.0
    %1667 = vmatpush1.msra.mxu0 0.0
    %1668 = vmatprep.subr.mxu0 0.0
    %1669 = vmatpush1.msra.mxu0 0.0
    %1670 = vmatprep.subr.mxu0 0.0
    %1671 = vmatpush1.msra.mxu0 0.0
    %1672 = vmatprep.subr.mxu0 0.0
    %1673 = vmatpush1.msra.mxu0 0.0
    %1674 = vmatprep.subr.mxu0 0.0
    %1675 = vmatpush1.msra.mxu0 0.0
    %1676 = vmatprep.subr.mxu0 0.0
    %1677 = vmatpush1.msra.mxu0 0.0
    %1678 = vmatprep.subr.mxu0 0.0
    %1679 = vmatpush1.msra.mxu0 0.0
    %1680 = vmatprep.subr.mxu0 0.0
    %1681 = vmatpush1.msra.mxu0 0.0
    %1682 = vmatprep.subr.mxu0 0.0
    %1683 = vmatpush1.msra.mxu0 0.0
    %1684 = vmatprep.subr.mxu0 0.0
    %1685 = vmatpush1.msra.mxu0 0.0
    %1686 = vmatprep.subr.mxu0 0.0
    %1687 = vmatpush1.msra.mxu0 0.0
    %1688 = vmatprep.subr.mxu0 0.0
    %1689 = vmatpush1.msra.mxu0 %v208
    %1690 = vmatprep.subr.mxu0 0.0
    %1691 = vmatpush1.msra.mxu0 %v207
    %1692 = vmatprep.subr.mxu0 0.0
    %1693 = vmatpush1.msra.mxu0 %v206
    %1694 = vmatprep.subr.mxu0 0.0
    %1695 = vmatpush1.msra.mxu0 %v205
    %1696 = vmatprep.subr.mxu0 0.0
    %1697 = vmatpush2.msra.mxu0 0.0
    %1698 = vmatprep.subr.mxu0 0.0
    %1699 = vmatpush2.msra.mxu0 0.0
    %1700 = vmatprep.subr.mxu0 0.0
    %1701 = vmatpush2.msra.mxu0 0.0
    %1702 = vmatprep.subr.mxu0 0.0
    %1703 = vmatpush2.msra.mxu0 0.0
    %1704 = vmatprep.subr.mxu0 0.0
    %1705 = vmatpush2.msra.mxu0 0.0
    %1706 = vmatprep.subr.mxu0 0.0
    %1707 = vmatpush2.msra.mxu0 0.0
    %1708 = vmatprep.subr.mxu0 0.0
    %1709 = vmatpush2.msra.mxu0 0.0
    %1710 = vmatprep.subr.mxu0 0.0
    %1711 = vmatpush2.msra.mxu0 0.0
    %1712 = vmatprep.subr.mxu0 0.0
    %1713 = vmatpush2.msra.mxu0 0.0
    %1714 = vmatprep.subr.mxu0 0.0
    %1715 = vmatpush2.msra.mxu0 0.0
    %1716 = vmatprep.subr.mxu0 0.0
    %1717 = vmatpush2.msra.mxu0 0.0
    %1718 = vmatprep.subr.mxu0 0.0
    %1719 = vmatpush2.msra.mxu0 0.0
    %1720 = vmatprep.subr.mxu0 0.0
    %1721 = vmatpush2.msra.mxu0 0.0
    %1722 = vmatprep.subr.mxu0 0.0
    %1723 = vmatpush2.msra.mxu0 0.0
    %1724 = vmatprep.subr.mxu0 0.0
    %1725 = vmatpush2.msra.mxu0 0.0
    %1726 = vmatprep.subr.mxu0 0.0
    %1727 = vmatpush2.msra.mxu0 0.0
    %1728 = vmatprep.mubr.f32.mxu0 0.0
    %1729 = vmatmul.mubr.f32.gmra.mxu0 %v1662
    %v1730 = vpop.f32.mrf.mxu0
    %v1731 = vadd.f32 0.0, %v1730
    %v1732 = vpop.f32.mrf.mxu0
    %1733 = vdwg.mxu0
    %1735 = vrot.lane.b32.xlu0 %v1658, 32
    %v1736 = vpop.permute.xlu0 %1735
    %v1737 = vsel %vm67, %v1736, 0
    %1739 = vmatprep.subr.mxu0 0.0
    %1740 = vmatpush1.msra.mxu0 0.0
    %1741 = vmatprep.subr.mxu0 0.0
    %1742 = vmatpush1.msra.mxu0 0.0
    %1743 = vmatprep.subr.mxu0 0.0
    %1744 = vmatpush1.msra.mxu0 0.0
    %1745 = vmatprep.subr.mxu0 0.0
    %1746 = vmatpush1.msra.mxu0 0.0
    %1747 = vmatprep.subr.mxu0 0.0
    %1748 = vmatpush1.msra.mxu0 0.0
    %1749 = vmatprep.subr.mxu0 0.0
    %1750 = vmatpush1.msra.mxu0 0.0
    %1751 = vmatprep.subr.mxu0 0.0
    %1752 = vmatpush1.msra.mxu0 0.0
    %1753 = vmatprep.subr.mxu0 0.0
    %1754 = vmatpush1.msra.mxu0 0.0
    %1755 = vmatprep.subr.mxu0 0.0
    %1756 = vmatpush1.msra.mxu0 0.0
    %1757 = vmatprep.subr.mxu0 0.0
    %1758 = vmatpush1.msra.mxu0 0.0
    %1759 = vmatprep.subr.mxu0 0.0
    %1760 = vmatpush1.msra.mxu0 0.0
    %1761 = vmatprep.subr.mxu0 0.0
    %1762 = vmatpush1.msra.mxu0 0.0
    %1763 = vmatprep.subr.mxu0 0.0
    %1764 = vmatpush1.msra.mxu0 %v204
    %1765 = vmatprep.subr.mxu0 0.0
    %1766 = vmatpush1.msra.mxu0 %v203
    %1767 = vmatprep.subr.mxu0 0.0
    %1768 = vmatpush1.msra.mxu0 %v202
    %1769 = vmatprep.subr.mxu0 0.0
    %1770 = vmatpush1.msra.mxu0 %v201
    %1771 = vmatprep.subr.mxu0 0.0
    %1772 = vmatpush2.msra.mxu0 0.0
    %1773 = vmatprep.subr.mxu0 0.0
    %1774 = vmatpush2.msra.mxu0 0.0
    %1775 = vmatprep.subr.mxu0 0.0
    %1776 = vmatpush2.msra.mxu0 0.0
    %1777 = vmatprep.subr.mxu0 0.0
    %1778 = vmatpush2.msra.mxu0 0.0
    %1779 = vmatprep.subr.mxu0 0.0
    %1780 = vmatpush2.msra.mxu0 0.0
    %1781 = vmatprep.subr.mxu0 0.0
    %1782 = vmatpush2.msra.mxu0 0.0
    %1783 = vmatprep.subr.mxu0 0.0
    %1784 = vmatpush2.msra.mxu0 0.0
    %1785 = vmatprep.subr.mxu0 0.0
    %1786 = vmatpush2.msra.mxu0 0.0
    %1787 = vmatprep.subr.mxu0 0.0
    %1788 = vmatpush2.msra.mxu0 0.0
    %1789 = vmatprep.subr.mxu0 0.0
    %1790 = vmatpush2.msra.mxu0 0.0
    %1791 = vmatprep.subr.mxu0 0.0
    %1792 = vmatpush2.msra.mxu0 0.0
    %1793 = vmatprep.subr.mxu0 0.0
    %1794 = vmatpush2.msra.mxu0 0.0
    %1795 = vmatprep.subr.mxu0 0.0
    %1796 = vmatpush2.msra.mxu0 0.0
    %1797 = vmatprep.subr.mxu0 0.0
    %1798 = vmatpush2.msra.mxu0 0.0
    %1799 = vmatprep.subr.mxu0 0.0
    %1800 = vmatpush2.msra.mxu0 0.0
    %1801 = vmatprep.subr.mxu0 0.0
    %1802 = vmatpush2.msra.mxu0 0.0
    %1803 = vmatprep.mubr.f32.mxu0 0.0
    %1804 = vmatmul.mubr.f32.gmra.mxu0 %v1737
    %v1805 = vpop.f32.mrf.mxu0
    %v1806 = vadd.f32 %v1731, %v1805
    %v1807 = vpop.f32.mrf.mxu0
    %1808 = vdwg.mxu0
    %v1809 = vadd.f32 %v1806, %v214
    %v1810 = vxor.u32 %v1809, 2147483648
    %v1811 = vmul.f32 %v1810, 1.442695
    %v1812 = vpow.pop %v1811
    %v1813 = vadd.f32 %v1812, 1.0
    %v1814 = vrcp.pop %v1813
    %v1815 = vmul.f32 1.0, %v1814
    %v1816 = vtanh.pop %v1809
    %v1817 = vmul.f32 %v1815, %v1557
    %1819 = vrot.lane.b32.xlu0 %v1816, 64
    %v1820 = vpop.permute.xlu0 %1819
    %v1822 = vmul.f32 %v1815, %v1820
    %1824 = vrot.lane.b32.xlu0 %v1822, 32
    %v1825 = vpop.permute.xlu0 %1824
    %v1827 = vadd.f32 %v1817, %v1825
    %v1828 = vtanh.pop %v1827
    %1830 = vrot.lane.b32.xlu0 %v1828, 64
    %v1831 = vpop.permute.xlu0 %1830
    %v1833 = vmul.f32 %v1815, %v1831
    %1834 = vmatprep.subr.mxu0 0.0
    %1835 = vmatpush1.msra.mxu0 0.0
    %1836 = vmatprep.subr.mxu0 0.0
    %1837 = vmatpush1.msra.mxu0 0.0
    %1838 = vmatprep.subr.mxu0 0.0
    %1839 = vmatpush1.msra.mxu0 0.0
    %1840 = vmatprep.subr.mxu0 0.0
    %1841 = vmatpush1.msra.mxu0 0.0
    %1842 = vmatprep.subr.mxu0 0.0
    %1843 = vmatpush1.msra.mxu0 0.0
    %1844 = vmatprep.subr.mxu0 0.0
    %1845 = vmatpush1.msra.mxu0 0.0
    %1846 = vmatprep.subr.mxu0 0.0
    %1847 = vmatpush1.msra.mxu0 0.0
    %1848 = vmatprep.subr.mxu0 0.0
    %1849 = vmatpush1.msra.mxu0 0.0
    %1850 = vmatprep.subr.mxu0 0.0
    %1851 = vmatpush1.msra.mxu0 0.0
    %1852 = vmatprep.subr.mxu0 0.0
    %1853 = vmatpush1.msra.mxu0 0.0
    %1854 = vmatprep.subr.mxu0 0.0
    %1855 = vmatpush1.msra.mxu0 0.0
    %1856 = vmatprep.subr.mxu0 0.0
    %1857 = vmatpush1.msra.mxu0 0.0
    %1858 = vmatprep.subr.mxu0 0.0
    %1859 = vmatpush1.msra.mxu0 %v200
    %1860 = vmatprep.subr.mxu0 0.0
    %1861 = vmatpush1.msra.mxu0 %v199
    %1862 = vmatprep.subr.mxu0 0.0
    %1863 = vmatpush1.msra.mxu0 %v198
    %1864 = vmatprep.subr.mxu0 0.0
    %1865 = vmatpush1.msra.mxu0 %v197
    %1866 = vmatprep.subr.mxu0 0.0
    %1867 = vmatpush2.msra.mxu0 0.0
    %1868 = vmatprep.subr.mxu0 0.0
    %1869 = vmatpush2.msra.mxu0 0.0
    %1870 = vmatprep.subr.mxu0 0.0
    %1871 = vmatpush2.msra.mxu0 0.0
    %1872 = vmatprep.subr.mxu0 0.0
    %1873 = vmatpush2.msra.mxu0 0.0
    %1874 = vmatprep.subr.mxu0 0.0
    %1875 = vmatpush2.msra.mxu0 0.0
    %1876 = vmatprep.subr.mxu0 0.0
    %1877 = vmatpush2.msra.mxu0 0.0
    %1878 = vmatprep.subr.mxu0 0.0
    %1879 = vmatpush2.msra.mxu0 0.0
    %1880 = vmatprep.subr.mxu0 0.0
    %1881 = vmatpush2.msra.mxu0 0.0
    %1882 = vmatprep.subr.mxu0 0.0
    %1883 = vmatpush2.msra.mxu0 0.0
    %1884 = vmatprep.subr.mxu0 0.0
    %1885 = vmatpush2.msra.mxu0 0.0
    %1886 = vmatprep.subr.mxu0 0.0
    %1887 = vmatpush2.msra.mxu0 0.0
    %1888 = vmatprep.subr.mxu0 0.0
    %1889 = vmatpush2.msra.mxu0 0.0
    %1890 = vmatprep.subr.mxu0 0.0
    %1891 = vmatpush2.msra.mxu0 0.0
    %1892 = vmatprep.subr.mxu0 0.0
    %1893 = vmatpush2.msra.mxu0 0.0
    %1894 = vmatprep.subr.mxu0 0.0
    %1895 = vmatpush2.msra.mxu0 0.0
    %1896 = vmatprep.subr.mxu0 0.0
    %1897 = vmatpush2.msra.mxu0 0.0
    %1898 = vmatprep.mubr.f32.mxu0 0.0
    %1899 = vmatmul.mubr.f32.gmra.mxu0 %v1737
    %v1900 = vpop.f32.mrf.mxu0
    %v1901 = vadd.f32 0.0, %v1900
    %v1902 = vpop.f32.mrf.mxu0
    %1903 = vdwg.mxu0
    %v1904 = vadd.f32 %v189, %v1901
    %v1905 = vxor.u32 %v1904, 2147483648
    %v1906 = vmul.f32 %v1905, 1.442695
    %v1907 = vpow.pop %v1906
    %v1908 = vadd.f32 %v1907, 1.0
    %v1909 = vrcp.pop %v1908
    %v1910 = vmul.f32 1.0, %v1909
    %v1911 = vtanh.pop %v1904
    %v1912 = vmul.f32 %v1910, %v1652
    %1914 = vrot.lane.b32.xlu0 %v1911, 64
    %v1915 = vpop.permute.xlu0 %1914
    %v1917 = vmul.f32 %v1910, %v1915
    %1919 = vrot.lane.b32.xlu0 %v1917, 32
    %v1920 = vpop.permute.xlu0 %1919
    %v1922 = vadd.f32 %v1912, %v1920
    %v1923 = vtanh.pop %v1922
    %1925 = vrot.lane.b32.xlu0 %v1923, 64
    %v1926 = vpop.permute.xlu0 %1925
    %v1928 = vmul.f32 %v1910, %v1926
    %1930 = vrot.lane.b32.xlu0 %v1833, 32
    %v1931 = vpop.permute.xlu0 %1930
    %v1932 = vsel %vm67, %v1931, 0
    %1934 = vmatprep.subr.mxu0 0.0
    %1935 = vmatpush1.msra.mxu0 0.0
    %1936 = vmatprep.subr.mxu0 0.0
    %1937 = vmatpush1.msra.mxu0 0.0
    %1938 = vmatprep.subr.mxu0 0.0
    %1939 = vmatpush1.msra.mxu0 0.0
    %1940 = vmatprep.subr.mxu0 0.0
    %1941 = vmatpush1.msra.mxu0 0.0
    %1942 = vmatprep.subr.mxu0 0.0
    %1943 = vmatpush1.msra.mxu0 0.0
    %1944 = vmatprep.subr.mxu0 0.0
    %1945 = vmatpush1.msra.mxu0 0.0
    %1946 = vmatprep.subr.mxu0 0.0
    %1947 = vmatpush1.msra.mxu0 0.0
    %1948 = vmatprep.subr.mxu0 0.0
    %1949 = vmatpush1.msra.mxu0 0.0
    %1950 = vmatprep.subr.mxu0 0.0
    %1951 = vmatpush1.msra.mxu0 0.0
    %1952 = vmatprep.subr.mxu0 0.0
    %1953 = vmatpush1.msra.mxu0 0.0
    %1954 = vmatprep.subr.mxu0 0.0
    %1955 = vmatpush1.msra.mxu0 0.0
    %1956 = vmatprep.subr.mxu0 0.0
    %1957 = vmatpush1.msra.mxu0 0.0
    %1958 = vmatprep.subr.mxu0 0.0
    %1959 = vmatpush1.msra.mxu0 %v208
    %1960 = vmatprep.subr.mxu0 0.0
    %1961 = vmatpush1.msra.mxu0 %v207
    %1962 = vmatprep.subr.mxu0 0.0
    %1963 = vmatpush1.msra.mxu0 %v206
    %1964 = vmatprep.subr.mxu0 0.0
    %1965 = vmatpush1.msra.mxu0 %v205
    %1966 = vmatprep.subr.mxu0 0.0
    %1967 = vmatpush2.msra.mxu0 0.0
    %1968 = vmatprep.subr.mxu0 0.0
    %1969 = vmatpush2.msra.mxu0 0.0
    %1970 = vmatprep.subr.mxu0 0.0
    %1971 = vmatpush2.msra.mxu0 0.0
    %1972 = vmatprep.subr.mxu0 0.0
    %1973 = vmatpush2.msra.mxu0 0.0
    %1974 = vmatprep.subr.mxu0 0.0
    %1975 = vmatpush2.msra.mxu0 0.0
    %1976 = vmatprep.subr.mxu0 0.0
    %1977 = vmatpush2.msra.mxu0 0.0
    %1978 = vmatprep.subr.mxu0 0.0
    %1979 = vmatpush2.msra.mxu0 0.0
    %1980 = vmatprep.subr.mxu0 0.0
    %1981 = vmatpush2.msra.mxu0 0.0
    %1982 = vmatprep.subr.mxu0 0.0
    %1983 = vmatpush2.msra.mxu0 0.0
    %1984 = vmatprep.subr.mxu0 0.0
    %1985 = vmatpush2.msra.mxu0 0.0
    %1986 = vmatprep.subr.mxu0 0.0
    %1987 = vmatpush2.msra.mxu0 0.0
    %1988 = vmatprep.subr.mxu0 0.0
    %1989 = vmatpush2.msra.mxu0 0.0
    %1990 = vmatprep.subr.mxu0 0.0
    %1991 = vmatpush2.msra.mxu0 0.0
    %1992 = vmatprep.subr.mxu0 0.0
    %1993 = vmatpush2.msra.mxu0 0.0
    %1994 = vmatprep.subr.mxu0 0.0
    %1995 = vmatpush2.msra.mxu0 0.0
    %1996 = vmatprep.subr.mxu0 0.0
    %1997 = vmatpush2.msra.mxu0 0.0
    %1998 = vmatprep.mubr.f32.mxu0 0.0
    %1999 = vmatmul.mubr.f32.gmra.mxu0 %v1932
    %v2000 = vpop.f32.mrf.mxu0
    %v2001 = vadd.f32 0.0, %v2000
    %v2002 = vpop.f32.mrf.mxu0
    %2003 = vdwg.mxu0
    %2005 = vrot.lane.b32.xlu0 %v1928, 32
    %v2006 = vpop.permute.xlu0 %2005
    %v2007 = vsel %vm67, %v2006, 0
    %2009 = vmatprep.subr.mxu0 0.0
    %2010 = vmatpush1.msra.mxu0 0.0
    %2011 = vmatprep.subr.mxu0 0.0
    %2012 = vmatpush1.msra.mxu0 0.0
    %2013 = vmatprep.subr.mxu0 0.0
    %2014 = vmatpush1.msra.mxu0 0.0
    %2015 = vmatprep.subr.mxu0 0.0
    %2016 = vmatpush1.msra.mxu0 0.0
    %2017 = vmatprep.subr.mxu0 0.0
    %2018 = vmatpush1.msra.mxu0 0.0
    %2019 = vmatprep.subr.mxu0 0.0
    %2020 = vmatpush1.msra.mxu0 0.0
    %2021 = vmatprep.subr.mxu0 0.0
    %2022 = vmatpush1.msra.mxu0 0.0
    %2023 = vmatprep.subr.mxu0 0.0
    %2024 = vmatpush1.msra.mxu0 0.0
    %2025 = vmatprep.subr.mxu0 0.0
    %2026 = vmatpush1.msra.mxu0 0.0
    %2027 = vmatprep.subr.mxu0 0.0
    %2028 = vmatpush1.msra.mxu0 0.0
    %2029 = vmatprep.subr.mxu0 0.0
    %2030 = vmatpush1.msra.mxu0 0.0
    %2031 = vmatprep.subr.mxu0 0.0
    %2032 = vmatpush1.msra.mxu0 0.0
    %2033 = vmatprep.subr.mxu0 0.0
    %2034 = vmatpush1.msra.mxu0 %v204
    %2035 = vmatprep.subr.mxu0 0.0
    %2036 = vmatpush1.msra.mxu0 %v203
    %2037 = vmatprep.subr.mxu0 0.0
    %2038 = vmatpush1.msra.mxu0 %v202
    %2039 = vmatprep.subr.mxu0 0.0
    %2040 = vmatpush1.msra.mxu0 %v201
    %2041 = vmatprep.subr.mxu0 0.0
    %2042 = vmatpush2.msra.mxu0 0.0
    %2043 = vmatprep.subr.mxu0 0.0
    %2044 = vmatpush2.msra.mxu0 0.0
    %2045 = vmatprep.subr.mxu0 0.0
    %2046 = vmatpush2.msra.mxu0 0.0
    %2047 = vmatprep.subr.mxu0 0.0
    %2048 = vmatpush2.msra.mxu0 0.0
    %2049 = vmatprep.subr.mxu0 0.0
    %2050 = vmatpush2.msra.mxu0 0.0
    %2051 = vmatprep.subr.mxu0 0.0
    %2052 = vmatpush2.msra.mxu0 0.0
    %2053 = vmatprep.subr.mxu0 0.0
    %2054 = vmatpush2.msra.mxu0 0.0
    %2055 = vmatprep.subr.mxu0 0.0
    %2056 = vmatpush2.msra.mxu0 0.0
    %2057 = vmatprep.subr.mxu0 0.0
    %2058 = vmatpush2.msra.mxu0 0.0
    %2059 = vmatprep.subr.mxu0 0.0
    %2060 = vmatpush2.msra.mxu0 0.0
    %2061 = vmatprep.subr.mxu0 0.0
    %2062 = vmatpush2.msra.mxu0 0.0
    %2063 = vmatprep.subr.mxu0 0.0
    %2064 = vmatpush2.msra.mxu0 0.0
    %2065 = vmatprep.subr.mxu0 0.0
    %2066 = vmatpush2.msra.mxu0 0.0
    %2067 = vmatprep.subr.mxu0 0.0
    %2068 = vmatpush2.msra.mxu0 0.0
    %2069 = vmatprep.subr.mxu0 0.0
    %2070 = vmatpush2.msra.mxu0 0.0
    %2071 = vmatprep.subr.mxu0 0.0
    %2072 = vmatpush2.msra.mxu0 0.0
    %2073 = vmatprep.mubr.f32.mxu0 0.0
    %2074 = vmatmul.mubr.f32.gmra.mxu0 %v2007
    %v2075 = vpop.f32.mrf.mxu0
    %v2076 = vadd.f32 %v2001, %v2075
    %v2077 = vpop.f32.mrf.mxu0
    %2078 = vdwg.mxu0
    %v2079 = vadd.f32 %v2076, %v214
    %v2080 = vxor.u32 %v2079, 2147483648
    %v2081 = vmul.f32 %v2080, 1.442695
    %v2082 = vpow.pop %v2081
    %v2083 = vadd.f32 %v2082, 1.0
    %v2084 = vrcp.pop %v2083
    %v2085 = vmul.f32 1.0, %v2084
    %v2086 = vtanh.pop %v2079
    %v2087 = vmul.f32 %v2085, %v1827
    %2089 = vrot.lane.b32.xlu0 %v2086, 64
    %v2090 = vpop.permute.xlu0 %2089
    %v2092 = vmul.f32 %v2085, %v2090
    %2094 = vrot.lane.b32.xlu0 %v2092, 32
    %v2095 = vpop.permute.xlu0 %2094
    %v2097 = vadd.f32 %v2087, %v2095
    %v2098 = vtanh.pop %v2097
    %2100 = vrot.lane.b32.xlu0 %v2098, 64
    %v2101 = vpop.permute.xlu0 %2100
    %v2103 = vmul.f32 %v2085, %v2101
    %2104 = vmatprep.subr.mxu0 0.0
    %2105 = vmatpush1.msra.mxu0 0.0
    %2106 = vmatprep.subr.mxu0 0.0
    %2107 = vmatpush1.msra.mxu0 0.0
    %2108 = vmatprep.subr.mxu0 0.0
    %2109 = vmatpush1.msra.mxu0 0.0
    %2110 = vmatprep.subr.mxu0 0.0
    %2111 = vmatpush1.msra.mxu0 0.0
    %2112 = vmatprep.subr.mxu0 0.0
    %2113 = vmatpush1.msra.mxu0 0.0
    %2114 = vmatprep.subr.mxu0 0.0
    %2115 = vmatpush1.msra.mxu0 0.0
    %2116 = vmatprep.subr.mxu0 0.0
    %2117 = vmatpush1.msra.mxu0 0.0
    %2118 = vmatprep.subr.mxu0 0.0
    %2119 = vmatpush1.msra.mxu0 0.0
    %2120 = vmatprep.subr.mxu0 0.0
    %2121 = vmatpush1.msra.mxu0 0.0
    %2122 = vmatprep.subr.mxu0 0.0
    %2123 = vmatpush1.msra.mxu0 0.0
    %2124 = vmatprep.subr.mxu0 0.0
    %2125 = vmatpush1.msra.mxu0 0.0
    %2126 = vmatprep.subr.mxu0 0.0
    %2127 = vmatpush1.msra.mxu0 0.0
    %2128 = vmatprep.subr.mxu0 0.0
    %2129 = vmatpush1.msra.mxu0 %v200
    %2130 = vmatprep.subr.mxu0 0.0
    %2131 = vmatpush1.msra.mxu0 %v199
    %2132 = vmatprep.subr.mxu0 0.0
    %2133 = vmatpush1.msra.mxu0 %v198
    %2134 = vmatprep.subr.mxu0 0.0
    %2135 = vmatpush1.msra.mxu0 %v197
    %2136 = vmatprep.subr.mxu0 0.0
    %2137 = vmatpush2.msra.mxu0 0.0
    %2138 = vmatprep.subr.mxu0 0.0
    %2139 = vmatpush2.msra.mxu0 0.0
    %2140 = vmatprep.subr.mxu0 0.0
    %2141 = vmatpush2.msra.mxu0 0.0
    %2142 = vmatprep.subr.mxu0 0.0
    %2143 = vmatpush2.msra.mxu0 0.0
    %2144 = vmatprep.subr.mxu0 0.0
    %2145 = vmatpush2.msra.mxu0 0.0
    %2146 = vmatprep.subr.mxu0 0.0
    %2147 = vmatpush2.msra.mxu0 0.0
    %2148 = vmatprep.subr.mxu0 0.0
    %2149 = vmatpush2.msra.mxu0 0.0
    %2150 = vmatprep.subr.mxu0 0.0
    %2151 = vmatpush2.msra.mxu0 0.0
    %2152 = vmatprep.subr.mxu0 0.0
    %2153 = vmatpush2.msra.mxu0 0.0
    %2154 = vmatprep.subr.mxu0 0.0
    %2155 = vmatpush2.msra.mxu0 0.0
    %2156 = vmatprep.subr.mxu0 0.0
    %2157 = vmatpush2.msra.mxu0 0.0
    %2158 = vmatprep.subr.mxu0 0.0
    %2159 = vmatpush2.msra.mxu0 0.0
    %2160 = vmatprep.subr.mxu0 0.0
    %2161 = vmatpush2.msra.mxu0 0.0
    %2162 = vmatprep.subr.mxu0 0.0
    %2163 = vmatpush2.msra.mxu0 0.0
    %2164 = vmatprep.subr.mxu0 0.0
    %2165 = vmatpush2.msra.mxu0 0.0
    %2166 = vmatprep.subr.mxu0 0.0
    %2167 = vmatpush2.msra.mxu0 0.0
    %2168 = vmatprep.mubr.f32.mxu0 0.0
    %2169 = vmatmul.mubr.f32.gmra.mxu0 %v2007
    %v2170 = vpop.f32.mrf.mxu0
    %v2171 = vadd.f32 0.0, %v2170
    %v2172 = vpop.f32.mrf.mxu0
    %2173 = vdwg.mxu0
    %v2174 = vadd.f32 %v194, %v2171
    %v2175 = vxor.u32 %v2174, 2147483648
    %v2176 = vmul.f32 %v2175, 1.442695
    %v2177 = vpow.pop %v2176
    %v2178 = vadd.f32 %v2177, 1.0
    %v2179 = vrcp.pop %v2178
    %v2180 = vmul.f32 1.0, %v2179
    %v2181 = vtanh.pop %v2174
    %v2182 = vmul.f32 %v2180, %v1922
    %2184 = vrot.lane.b32.xlu0 %v2181, 64
    %v2185 = vpop.permute.xlu0 %2184
    %v2187 = vmul.f32 %v2180, %v2185
    %2189 = vrot.lane.b32.xlu0 %v2187, 32
    %v2190 = vpop.permute.xlu0 %2189
    %v2192 = vadd.f32 %v2182, %v2190
    %v2193 = vtanh.pop %v2192
    %2195 = vrot.lane.b32.xlu0 %v2193, 64
    %v2196 = vpop.permute.xlu0 %2195
    %v2198 = vmul.f32 %v2180, %v2196
    %2200 = vrot.lane.b32.xlu0 %v2103, 32
    %v2201 = vpop.permute.xlu0 %2200
    %v2202 = vsel %vm67, %v2201, 0
    %2204 = vmatprep.subr.mxu0 0.0
    %2205 = vmatpush1.msra.mxu0 0.0
    %2206 = vmatprep.subr.mxu0 0.0
    %2207 = vmatpush1.msra.mxu0 0.0
    %2208 = vmatprep.subr.mxu0 0.0
    %2209 = vmatpush1.msra.mxu0 0.0
    %2210 = vmatprep.subr.mxu0 0.0
    %2211 = vmatpush1.msra.mxu0 0.0
    %2212 = vmatprep.subr.mxu0 0.0
    %2213 = vmatpush1.msra.mxu0 0.0
    %2214 = vmatprep.subr.mxu0 0.0
    %2215 = vmatpush1.msra.mxu0 0.0
    %2216 = vmatprep.subr.mxu0 0.0
    %2217 = vmatpush1.msra.mxu0 0.0
    %2218 = vmatprep.subr.mxu0 0.0
    %2219 = vmatpush1.msra.mxu0 0.0
    %2220 = vmatprep.subr.mxu0 0.0
    %2221 = vmatpush1.msra.mxu0 0.0
    %2222 = vmatprep.subr.mxu0 0.0
    %2223 = vmatpush1.msra.mxu0 0.0
    %2224 = vmatprep.subr.mxu0 0.0
    %2225 = vmatpush1.msra.mxu0 0.0
    %2226 = vmatprep.subr.mxu0 0.0
    %2227 = vmatpush1.msra.mxu0 0.0
    %2228 = vmatprep.subr.mxu0 0.0
    %2229 = vmatpush1.msra.mxu0 %v208
    %2230 = vmatprep.subr.mxu0 0.0
    %2231 = vmatpush1.msra.mxu0 %v207
    %2232 = vmatprep.subr.mxu0 0.0
    %2233 = vmatpush1.msra.mxu0 %v206
    %2234 = vmatprep.subr.mxu0 0.0
    %2235 = vmatpush1.msra.mxu0 %v205
    %2236 = vmatprep.subr.mxu0 0.0
    %2237 = vmatpush2.msra.mxu0 0.0
    %2238 = vmatprep.subr.mxu0 0.0
    %2239 = vmatpush2.msra.mxu0 0.0
    %2240 = vmatprep.subr.mxu0 0.0
    %2241 = vmatpush2.msra.mxu0 0.0
    %2242 = vmatprep.subr.mxu0 0.0
    %2243 = vmatpush2.msra.mxu0 0.0
    %2244 = vmatprep.subr.mxu0 0.0
    %2245 = vmatpush2.msra.mxu0 0.0
    %2246 = vmatprep.subr.mxu0 0.0
    %2247 = vmatpush2.msra.mxu0 0.0
    %2248 = vmatprep.subr.mxu0 0.0
    %2249 = vmatpush2.msra.mxu0 0.0
    %2250 = vmatprep.subr.mxu0 0.0
    %2251 = vmatpush2.msra.mxu0 0.0
    %2252 = vmatprep.subr.mxu0 0.0
    %2253 = vmatpush2.msra.mxu0 0.0
    %2254 = vmatprep.subr.mxu0 0.0
    %2255 = vmatpush2.msra.mxu0 0.0
    %2256 = vmatprep.subr.mxu0 0.0
    %2257 = vmatpush2.msra.mxu0 0.0
    %2258 = vmatprep.subr.mxu0 0.0
    %2259 = vmatpush2.msra.mxu0 0.0
    %2260 = vmatprep.subr.mxu0 0.0
    %2261 = vmatpush2.msra.mxu0 0.0
    %2262 = vmatprep.subr.mxu0 0.0
    %2263 = vmatpush2.msra.mxu0 0.0
    %2264 = vmatprep.subr.mxu0 0.0
    %2265 = vmatpush2.msra.mxu0 0.0
    %2266 = vmatprep.subr.mxu0 0.0
    %2267 = vmatpush2.msra.mxu0 0.0
    %2268 = vmatprep.mubr.f32.mxu0 0.0
    %2269 = vmatmul.mubr.f32.gmra.mxu0 %v2202
    %v2270 = vpop.f32.mrf.mxu0
    %v2271 = vadd.f32 0.0, %v2270
    %v2272 = vpop.f32.mrf.mxu0
    %2273 = vdwg.mxu0
    %2275 = vrot.lane.b32.xlu0 %v2198, 32
    %v2276 = vpop.permute.xlu0 %2275
    %v2277 = vsel %vm67, %v2276, 0
    %2279 = vmatprep.subr.mxu0 0.0
    %2280 = vmatpush1.msra.mxu0 0.0
    %2281 = vmatprep.subr.mxu0 0.0
    %2282 = vmatpush1.msra.mxu0 0.0
    %2283 = vmatprep.subr.mxu0 0.0
    %2284 = vmatpush1.msra.mxu0 0.0
    %2285 = vmatprep.subr.mxu0 0.0
    %2286 = vmatpush1.msra.mxu0 0.0
    %2287 = vmatprep.subr.mxu0 0.0
    %2288 = vmatpush1.msra.mxu0 0.0
    %2289 = vmatprep.subr.mxu0 0.0
    %2290 = vmatpush1.msra.mxu0 0.0
    %2291 = vmatprep.subr.mxu0 0.0
    %2292 = vmatpush1.msra.mxu0 0.0
    %2293 = vmatprep.subr.mxu0 0.0
    %2294 = vmatpush1.msra.mxu0 0.0
    %2295 = vmatprep.subr.mxu0 0.0
    %2296 = vmatpush1.msra.mxu0 0.0
    %2297 = vmatprep.subr.mxu0 0.0
    %2298 = vmatpush1.msra.mxu0 0.0
    %2299 = vmatprep.subr.mxu0 0.0
    %2300 = vmatpush1.msra.mxu0 0.0
    %2301 = vmatprep.subr.mxu0 0.0
    %2302 = vmatpush1.msra.mxu0 0.0
    %2303 = vmatprep.subr.mxu0 0.0
    %2304 = vmatpush1.msra.mxu0 %v204
    %2305 = vmatprep.subr.mxu0 0.0
    %2306 = vmatpush1.msra.mxu0 %v203
    %2307 = vmatprep.subr.mxu0 0.0
    %2308 = vmatpush1.msra.mxu0 %v202
    %2309 = vmatprep.subr.mxu0 0.0
    %2310 = vmatpush1.msra.mxu0 %v201
    %2311 = vmatprep.subr.mxu0 0.0
    %2312 = vmatpush2.msra.mxu0 0.0
    %2313 = vmatprep.subr.mxu0 0.0
    %2314 = vmatpush2.msra.mxu0 0.0
    %2315 = vmatprep.subr.mxu0 0.0
    %2316 = vmatpush2.msra.mxu0 0.0
    %2317 = vmatprep.subr.mxu0 0.0
    %2318 = vmatpush2.msra.mxu0 0.0
    %2319 = vmatprep.subr.mxu0 0.0
    %2320 = vmatpush2.msra.mxu0 0.0
    %2321 = vmatprep.subr.mxu0 0.0
    %2322 = vmatpush2.msra.mxu0 0.0
    %2323 = vmatprep.subr.mxu0 0.0
    %2324 = vmatpush2.msra.mxu0 0.0
    %2325 = vmatprep.subr.mxu0 0.0
    %2326 = vmatpush2.msra.mxu0 0.0
    %2327 = vmatprep.subr.mxu0 0.0
    %2328 = vmatpush2.msra.mxu0 0.0
    %2329 = vmatprep.subr.mxu0 0.0
    %2330 = vmatpush2.msra.mxu0 0.0
    %2331 = vmatprep.subr.mxu0 0.0
    %2332 = vmatpush2.msra.mxu0 0.0
    %2333 = vmatprep.subr.mxu0 0.0
    %2334 = vmatpush2.msra.mxu0 0.0
    %2335 = vmatprep.subr.mxu0 0.0
    %2336 = vmatpush2.msra.mxu0 0.0
    %2337 = vmatprep.subr.mxu0 0.0
    %2338 = vmatpush2.msra.mxu0 0.0
    %2339 = vmatprep.subr.mxu0 0.0
    %2340 = vmatpush2.msra.mxu0 0.0
    %2341 = vmatprep.subr.mxu0 0.0
    %2342 = vmatpush2.msra.mxu0 0.0
    %2343 = vmatprep.mubr.f32.mxu0 0.0
    %2344 = vmatmul.mubr.f32.gmra.mxu0 %v2277
    %v2345 = vpop.f32.mrf.mxu0
    %v2346 = vadd.f32 %v2271, %v2345
    %v2347 = vpop.f32.mrf.mxu0
    %2348 = vdwg.mxu0
    %v2349 = vadd.f32 %v2346, %v214
    %v2350 = vxor.u32 %v2349, 2147483648
    %v2351 = vmul.f32 %v2350, 1.442695
    %v2352 = vpow.pop %v2351
    %v2353 = vadd.f32 %v2352, 1.0
    %v2354 = vrcp.pop %v2353
    %v2355 = vmul.f32 1.0, %v2354
    %v2356 = vtanh.pop %v2349
    %v2357 = vmul.f32 %v2355, %v2097
    %2359 = vrot.lane.b32.xlu0 %v2356, 64
    %v2360 = vpop.permute.xlu0 %2359
    %v2362 = vmul.f32 %v2355, %v2360
    %2364 = vrot.lane.b32.xlu0 %v2362, 32
    %v2365 = vpop.permute.xlu0 %2364
    %v2367 = vadd.f32 %v2357, %v2365
    %v2368 = vtanh.pop %v2367
    %2370 = vrot.lane.b32.xlu0 %v2368, 64
    %v2371 = vpop.permute.xlu0 %2370
    %v2373 = vmul.f32 %v2355, %v2371
    %v2374 = vld [vmem:[%s7] sm:$0x1]
    %v2376 = vlaneseq
    %v2377 = vshrl.u32 %v2376, 7
    %v2378 = vsub.s32 0, %v2377
    %v2379 = vrot.slane %v2374, %v2378
    %2380 = vrot.lane.b32.xlu0 %v2379, 96
    %v2381 = vpop.permute.xlu0 %2380
    %v2383 = vmul.f32 %v2373, %v2381
    %2385 = vrot.lane.b32.xlu0 %v2383, 32
    %v2386 = vpop.permute.xlu0 %2385
    %v2388 = vsel %vm67, %v2386, 0.0
    %2389 = vadd.xlane.f32.xlu0 %v2388
    %v2390 = vpop.xlane.xlu0 %2389
    %v2391 = vld [vmem:[#allocation2] sm:$0x1]
    %v2393 = vlaneseq
    %v2394 = vshrl.u32 %v2393, 7
    %v2395 = vsub.s32 0, %v2394
    %v2396 = vrot.slane %v2391, %v2395
    %v2398 = vadd.f32 %v2390, %v2396
    %v2399 = vxor.u32 %v2398, 2147483648
    %v2400 = vmul.f32 %v2399, 1.442695
    %v2401 = vpow.pop %v2400
    %v2402 = vadd.f32 %v2401, 1.0
    %v2403 = vrcp.pop %v2402
    %v2404 = vmul.f32 1.0, %v2403
    %vm2405 = vcmask 7168
    %2406 = vst.msk [vmem:[%s9] sm:$0xff] %vm2405, %v2404
    // Predicated region
    $region42: #{rnn_classifier_forward.1} parent=1 // pred_check
      _
    $region43: #{rnn_classifier_forward.1} parent=1 // pred_check_branch
      %2408 = sbr.rel (0) target = $region45
    $region44: #{rnn_classifier_forward.1} parent=1 // pred_region
      _
    $region45: #{rnn_classifier_forward.1} parent=1 // pred_fallthru
      _
    // Predicated region
    $region46: #{rnn_classifier_forward.1} parent=1 // pred_check
      _
    $region47: #{rnn_classifier_forward.1} parent=1 // pred_check_branch
      %2410 = sbr.rel (0) target = $region49
    $region48: #{rnn_classifier_forward.1} parent=1 // pred_region
      _
    $region49: #{rnn_classifier_forward.1} parent=1 // pred_fallthru
      _
    %2411 = vsyncpa [#allocation4], 1

</llo_original>
